<compile_context>
chip_gen: v5e
topology: v5e:2x2
jax: 0.10.0
libtpu: 0.0.40
codegen_flags: <defaults>
</compile_context>

<pallas_src>
import math
import functools

import jax
import jax.numpy as jnp
from jax.experimental import pallas as pl
from jax.experimental.pallas import tpu as pltpu


def _cparams(sem):
    # 32 MiB scoped VMEM: above the 16 MiB v5e default, equal to the v6e/v7x
    # scoped default; blocks here are tiny so this only buys pipeline headroom.
    return pltpu.CompilerParams(dimension_semantics=sem,
                                vmem_limit_bytes=32 * 1024 * 1024)


# ----------------------------------------------------------------------------
# Kernel 1: fused 1x1 conv Q/K/V, lane-dense orientation.
#   w (3C, C) bf16, x block (1, C, TN) f32, bias (3C, 1) f32 -> (1, 3C, TN) bf16
# ----------------------------------------------------------------------------
def qkv_fused_kernel(x_ref, w_ref, b_ref, o_ref):
    x = x_ref[0].astype(jnp.bfloat16)                                 # (C, TN)
    y = jnp.dot(w_ref[...], x, preferred_element_type=jnp.float32)   # (3C, TN) f32
    o_ref[0] = (y + b_ref[...]).astype(o_ref.dtype)


# ----------------------------------------------------------------------------
# Kernel 2: attention over patch tokens (1/sqrt(F) already folded into Wq).
#   qkv block (BB, S, 3F) bf16 -> out (BB, S, F) bf16; softmax math in f32.
# ----------------------------------------------------------------------------
def attention_kernel(qkv_ref, o_ref, *, F):
    qkv = qkv_ref[...]
    q = qkv[:, :, 0 * F:1 * F]
    k = qkv[:, :, 1 * F:2 * F]
    v = qkv[:, :, 2 * F:3 * F]
    s = jnp.einsum("bsf,btf->bst", q, k, preferred_element_type=jnp.float32)
    m = jnp.max(s, axis=-1, keepdims=True)
    p = jnp.exp(s - m)
    l = jnp.sum(p, axis=-1, keepdims=True)
    o = jnp.einsum("bst,btf->bsf", p.astype(jnp.bfloat16), v,
                   preferred_element_type=jnp.float32)
    # deferred normalisation via the (free-slot) EUP approximate reciprocal
    o_ref[...] = (o * pl.reciprocal(l, approx=True)).astype(o_ref.dtype)


# ----------------------------------------------------------------------------
# Kernel 3: output_linear = conv3x3(pad=1) + folded BatchNorm + LeakyReLU(0.2)
#   as one lane-dense im2col matmul (C_out, 9*C_in) x (9*C_in, H*W).
#   Halo handled with static lane rotations of the flat (C, H*W) image plus
#   edge masks -- no padded HBM copy of the activation.
# ----------------------------------------------------------------------------
def conv3x3_bn_lrelu_kernel(x_ref, w_ref, b_ref, m_ref, o_ref, *, H, W):
    HW = H * W
    img = x_ref[0]                                     # (C_in, HW) bf16
    taps = []
    for ky in range(3):
        for kx in range(3):
            t = ky * 3 + kx
            k = ((ky - 1) * W + (kx - 1)) % HW         # static rotate-left amount
            rolled = img if k == 0 else jnp.concatenate(
                [img[:, k:], img[:, :k]], axis=1)      # rolled[:,p] = img[:, (p+off) % HW]
            taps.append(rolled * m_ref[t:t + 1, :])    # zero out-of-image taps
    patches = jnp.concatenate(taps, axis=0)            # (9*C_in, HW) bf16 im2col
    y = jnp.dot(w_ref[...], patches,
                preferred_element_type=jnp.float32)    # (C_out, HW) f32
    y = y + b_ref[...]                                 # folded conv bias + BN shift
    o_ref[0] = jnp.where(y >= 0.0, y, 0.2 * y)         # LeakyReLU(0.2), f32 out


def _conv3x3_edge_masks(h, w, dtype):
    ys, xs = jnp.meshgrid(jnp.arange(h), jnp.arange(w), indexing="ij")
    rows = []
    for ky in range(3):
        for kx in range(3):
            dy, dx = ky - 1, kx - 1
            ok = (ys + dy >= 0) & (ys + dy < h) & (xs + dx >= 0) & (xs + dx < w)
            rows.append(ok.reshape(-1))
    return jnp.stack(rows, axis=0).astype(dtype)       # (9, h*w)


# ----------------------------------------------------------------------------
# Wrapper: full MultiScaleAttention forward (NCHW in / NCHW out, like torch)
# ----------------------------------------------------------------------------
def multi_scale_attention(x_nchw, params, patchsize):
    b, C, h, w = x_nchw.shape
    out_h = out_w = patchsize
    height, width = h // out_h, w // out_w
    S = out_h * out_w
    F_dim = C * height * width
    HW = h * w

    # ---- fold the attention scale into Wq/bq, fuse Q,K,V, transpose for a
    #      lane-dense (3C, C) x (C, pixels) GEMM ----
    scale = 1.0 / math.sqrt(F_dim)
    wqkv_t = jnp.concatenate([params["wq"] * scale, params["wk"], params["wv"]],
                             axis=1).T.astype(jnp.bfloat16)             # (3C, C)
    bqkv_t = jnp.concatenate([params["bq"] * scale, params["bk"], params["bv"]],
                             axis=1).T                                   # (3C, 1)

    # ---- 1x1 conv Q/K/V straight off the NCHW layout (reshape only) ----
    x_cm = x_nchw.reshape(b, C, HW)
    TN = HW if HW <= 1024 else 1024                    # lane tile (1024 = 8*128)
    qkv_cm = pl.pallas_call(
        qkv_fused_kernel,
        out_shape=jax.ShapeDtypeStruct((b, 3 * C, HW), jnp.bfloat16),
        grid=(b, pl.cdiv(HW, TN)),
        in_specs=[
            pl.BlockSpec((1, C, TN), lambda i, j: (i, 0, j)),
            pl.BlockSpec((3 * C, C), lambda i, j: (0, 0)),
            pl.BlockSpec((3 * C, 1), lambda i, j: (0, 0)),
        ],
        out_specs=pl.BlockSpec((1, 3 * C, TN), lambda i, j: (i, 0, j)),
        compiler_params=_cparams(("parallel", "parallel")),
    )(x_cm, wqkv_t, bqkv_t)

    # ---- tokenize ONCE on the fused tensor (channel-major -> torch token
    #      layout); q/k/v land in contiguous thirds of the feature axis ----
    qkv_tok = (qkv_cm.reshape(b, 3 * C, out_h, height, out_w, width)
               .transpose(0, 2, 4, 1, 3, 5)
               .reshape(b, S, 3 * F_dim))

    # ---- attention: BB batch elements per step; BB chosen so the grid has
    #      >= 2 steps whenever b >= 2 (keeps both v7x TensorCores busy) ----
    # NOTE: when b % BB != 0 the padded tail rows compute on garbage that is
    # discarded on store; harmless, but choose b a multiple of BB if possible.
    BB = min(8, max(1, (b + 1) // 2))
    o_t = pl.pallas_call(
        functools.partial(attention_kernel, F=F_dim),
        out_shape=jax.ShapeDtypeStruct((b, S, F_dim), jnp.bfloat16),
        grid=(pl.cdiv(b, BB),),
        in_specs=[pl.BlockSpec((BB, S, 3 * F_dim), lambda i: (i, 0, 0))],
        out_specs=pl.BlockSpec((BB, S, F_dim), lambda i: (i, 0, 0)),
        compiler_params=_cparams(("parallel",)),
    )(qkv_tok)

    # ---- un-tokenize straight to channel-major (conv + module-output layout),
    #      so nothing needs relayout after the conv ----
    o_cm = (o_t.reshape(b, out_h, out_w, C, height, width)
            .transpose(0, 3, 1, 4, 2, 5)
            .reshape(b, C, HW))

    # ---- fold BatchNorm (inference stats) into the conv weight/bias and
    #      reorder the weight to (C_out, 9*C_in) to match the in-kernel im2col ----
    a = params["bn_gamma"] / jnp.sqrt(params["bn_var"] + 1e-5)           # (1, C)
    w3f = params["w3"] * a[0][None, None, None, :]                        # (3,3,Ci,Co)
    w3m = (w3f.reshape(9, C, C).transpose(2, 0, 1)
           .reshape(C, 9 * C).astype(jnp.bfloat16))                       # (Co, 9*Ci)
    b3f = (a * params["b3"] + (params["bn_beta"] - a * params["bn_mean"])).T  # (C, 1)
    masks = _conv3x3_edge_masks(h, w, jnp.bfloat16)                        # (9, HW)

    # ---- output_linear: im2col conv3x3 + folded BN + LeakyReLU ----
    y_cm = pl.pallas_call(
        functools.partial(conv3x3_bn_lrelu_kernel, H=h, W=w),
        out_shape=jax.ShapeDtypeStruct((b, C, HW), jnp.float32),
        grid=(b,),
        in_specs=[
            pl.BlockSpec((1, C, HW), lambda i: (i, 0, 0)),
            pl.BlockSpec((C, 9 * C), lambda i: (0, 0)),
            pl.BlockSpec((C, 1), lambda i: (0, 0)),
            pl.BlockSpec((9, HW), lambda i: (0, 0)),
        ],
        out_specs=pl.BlockSpec((1, C, HW), lambda i: (i, 0, 0)),
        compiler_params=_cparams(("parallel",)),
    )(o_cm, w3m, b3f, masks)

    return y_cm.reshape(b, C, h, w)                                       # NCHW


# ----------------------------------------------------------------------------
# Pure-JAX reference (mirrors the torch module, for correctness check)
# ----------------------------------------------------------------------------
def reference(x_nchw, params, patchsize):
    b, C, h, w = x_nchw.shape
    out_h = out_w = patchsize
    height, width = h // out_h, w // out_w
    S, F_dim = out_h * out_w, C * height * width

    x_flat = jnp.transpose(x_nchw, (0, 2, 3, 1)).reshape(b * h * w, C)
    q = x_flat @ params["wq"] + params["bq"]
    k = x_flat @ params["wk"] + params["bk"]
    v = x_flat @ params["wv"] + params["bv"]

    def tok(t):
        t = t.reshape(b, h, w, C).transpose(0, 3, 1, 2)
        t = t.reshape(b, C, out_h, height, out_w, width)
        return t.transpose(0, 2, 4, 1, 3, 5).reshape(b, S, F_dim)

    q, k, v = tok(q), tok(k), tok(v)
    scores = jnp.einsum("bsf,btf->bst", q, k) / math.sqrt(F_dim)
    attn = jax.nn.softmax(scores, axis=-1)
    o = jnp.einsum("bst,btf->bsf", attn, v)
    o = o.reshape(b, out_h, out_w, C, height, width).transpose(0, 3, 1, 4, 2, 5)
    o = o.reshape(b, C, h, w)

    o_pad = jnp.pad(jnp.transpose(o, (0, 2, 3, 1)), ((0, 0), (1, 1), (1, 1), (0, 0)))
    acc = jnp.zeros((b, h, w, C), jnp.float32)
    for ky in range(3):
        for kx in range(3):
            acc = acc + jnp.einsum("bhwc,cd->bhwd",
                                   o_pad[:, ky:ky + h, kx:kx + w, :],
                                   params["w3"][ky, kx])
    y = acc + params["b3"][0]
    a = params["bn_gamma"][0] / jnp.sqrt(params["bn_var"][0] + 1e-5)
    y = y * a + (params["bn_beta"][0] - a * params["bn_mean"][0])
    y = jnp.where(y >= 0, y, 0.2 * y)
    return jnp.transpose(y, (0, 3, 1, 2))


# ----------------------------------------------------------------------------
def make_params(key, d_model):
    ks = jax.random.split(key, 8)
    s = 1.0 / math.sqrt(d_model)
    return {
        "wq": jax.random.normal(ks[0], (d_model, d_model), jnp.float32) * s,
        "wk": jax.random.normal(ks[1], (d_model, d_model), jnp.float32) * s,
        "wv": jax.random.normal(ks[2], (d_model, d_model), jnp.float32) * s,
        "bq": jax.random.normal(ks[3], (1, d_model), jnp.float32) * 0.1,
        "bk": jax.random.normal(ks[4], (1, d_model), jnp.float32) * 0.1,
        "bv": jax.random.normal(ks[5], (1, d_model), jnp.float32) * 0.1,
        "w3": jax.random.normal(ks[6], (3, 3, d_model, d_model), jnp.float32) * (s / 3.0),
        "b3": jax.random.normal(ks[7], (1, d_model), jnp.float32) * 0.1,
        "bn_gamma": jnp.full((1, d_model), 1.1, jnp.float32),
        "bn_beta": jnp.full((1, d_model), 0.05, jnp.float32),
        "bn_mean": jnp.full((1, d_model), 0.02, jnp.float32),
        "bn_var": jnp.full((1, d_model), 0.9, jnp.float32),
    }


if __name__ == "__main__":
    key = jax.random.PRNGKey(0)
    kx, kp = jax.random.split(key)

    batch, d_model, h, w = 2, 4, 16, 16
    patchsize = 4                       # -> 16 tokens of dim d_model*4*4 = 64

    x = jax.random.normal(kx, (batch, d_model, h, w), jnp.float32)   # NCHW like torch
    params = make_params(kp, d_model)

    fwd = jax.jit(multi_scale_attention, static_argnums=2)
    out = jax.block_until_ready(fwd(x, params, patchsize))

    ref = reference(x, params, patchsize)
    assert out.shape == (batch, d_model, h, w)
    assert out.dtype == jnp.float32
    # Tolerance covers the intentional numerics: bf16 MXU operands end-to-end,
    # bf16 inter-stage activations and the approximate EUP reciprocal in the
    # softmax (layout/indexing bugs would show as O(1) errors and still fail).
    assert jnp.allclose(out, ref, rtol=3e-2, atol=3e-2), "mismatch vs reference"

    print("KERNEL_OK")
</pallas_src>

<mosaic_0001>
module attributes {stable_mosaic.version = 11 : i64} {
  func.func @qkv_fused_kernel(%arg0: i32, %arg1: i32, %arg2: memref<1x4x256xf32, #tpu.memory_space<vmem>>, %arg3: memref<12x4xbf16, #tpu.memory_space<vmem>>, %arg4: memref<12x1xf32, #tpu.memory_space<vmem>>, %arg5: memref<1x12x256xbf16, #tpu.memory_space<vmem>>) attributes {dimension_semantics = [#tpu.dimension_semantics<parallel>, #tpu.dimension_semantics<parallel>], iteration_bounds = array<i64: 2, 1>, scalar_prefetch = 0 : i64, scratch_operands = 0 : i64, tpu.core_type = #tpu.core_type<tc>, window_params = [{transform_indices = @transform_0, window_bounds = array<i64: 1, 4, 256>}, {pipeline_mode = #tpu.pipeline_mode<synchronous>, transform_indices = @transform_1, window_bounds = array<i64: 12, 4>}, {pipeline_mode = #tpu.pipeline_mode<synchronous>, transform_indices = @transform_2, window_bounds = array<i64: 12, 1>}, {transform_indices = @transform_3, window_bounds = array<i64: 1, 12, 256>}]} {
    %c0 = arith.constant 0 : index
    %c0_0 = arith.constant 0 : index
    %c0_1 = arith.constant 0 : index
    %0 = vector.load %arg2[%c0, %c0_0, %c0_1] : memref<1x4x256xf32, #tpu.memory_space<vmem>>, vector<1x4x256xf32>
    %1 = vector.shape_cast %0 : vector<1x4x256xf32> to vector<4x256xf32>
    %2 = arith.truncf %1 : vector<4x256xf32> to vector<4x256xbf16>
    %c0_2 = arith.constant 0 : index
    %c0_3 = arith.constant 0 : index
    %3 = vector.load %arg3[%c0_2, %c0_3] : memref<12x4xbf16, #tpu.memory_space<vmem>>, vector<12x4xbf16>
    %cst = arith.constant dense<0.000000e+00> : vector<12x256xf32>
    %4 = tpu.matmul %3, %2, %cst {dimension_numbers = #tpu.dot_dimension_numbers<[1], [0], [0], [1], [0, 0, 1, 1], [], []>} : vector<12x4xbf16>, vector<4x256xbf16>, vector<12x256xf32> -> vector<12x256xf32>
    %c0_4 = arith.constant 0 : index
    %c0_5 = arith.constant 0 : index
    %5 = vector.load %arg4[%c0_4, %c0_5] : memref<12x1xf32, #tpu.memory_space<vmem>>, vector<12x1xf32>
    %6 = vector.broadcast %5 : vector<12x1xf32> to vector<12x256xf32>
    %7 = arith.addf %4, %6 : vector<12x256xf32>
    %8 = arith.truncf %7 : vector<12x256xf32> to vector<12x256xbf16>
    %c0_6 = arith.constant 0 : index
    %c0_7 = arith.constant 0 : index
    %c0_8 = arith.constant 0 : index
    %9 = vector.load %arg5[%c0_6, %c0_7, %c0_8] : memref<1x12x256xbf16, #tpu.memory_space<vmem>>, vector<1x12x256xbf16>
    %10 = vector.shape_cast %9 : vector<1x12x256xbf16> to vector<12x256xbf16>
    %11 = vector.shape_cast %8 : vector<12x256xbf16> to vector<1x12x256xbf16>
    tpu.vector_store %arg5[%c0_6, %c0_7, %c0_8], %11 {strides = array<i32>} : memref<1x12x256xbf16, #tpu.memory_space<vmem>>, vector<1x12x256xbf16>,
    return
  }
  func.func @transform_0(%arg0: i32, %arg1: i32) -> (i32, i32, i32) {
    %c0_i32 = arith.constant 0 : i32
    %c0_i32_0 = arith.constant 0 : i32
    return %arg0, %c0_i32, %arg1 : i32, i32, i32
  }
  func.func @transform_1(%arg0: i32, %arg1: i32) -> (i32, i32) {
    %c0_i32 = arith.constant 0 : i32
    %c0_i32_0 = arith.constant 0 : i32
    %c0_i32_1 = arith.constant 0 : i32
    return %c0_i32, %c0_i32_0 : i32, i32
  }
  func.func @transform_2(%arg0: i32, %arg1: i32) -> (i32, i32) {
    %c0_i32 = arith.constant 0 : i32
    %c0_i32_0 = arith.constant 0 : i32
    %c0_i32_1 = arith.constant 0 : i32
    return %c0_i32, %c0_i32_0 : i32, i32
  }
  func.func @transform_3(%arg0: i32, %arg1: i32) -> (i32, i32, i32) {
    %c0_i32 = arith.constant 0 : i32
    %c0_i32_0 = arith.constant 0 : i32
    return %arg0, %c0_i32, %arg1 : i32, i32, i32
  }
}

module attributes {stable_mosaic.version = 11 : i64} {
  func.func @attention_kernel(%arg0: i32, %arg1: memref<1x16x192xbf16, #tpu.memory_space<vmem>>, %arg2: memref<1x16x64xbf16, #tpu.memory_space<vmem>>) attributes {dimension_semantics = [#tpu.dimension_semantics<parallel>], iteration_bounds = array<i64: 2>, scalar_prefetch = 0 : i64, scratch_operands = 0 : i64, tpu.core_type = #tpu.core_type<tc>, window_params = [{transform_indices = @transform_0, window_bounds = array<i64: 1, 16, 192>}, {transform_indices = @transform_1, window_bounds = array<i64: 1, 16, 64>}]} {
    %c0 = arith.constant 0 : index
    %c0_0 = arith.constant 0 : index
    %c0_1 = arith.constant 0 : index
    %0 = vector.load %arg1[%c0, %c0_0, %c0_1] : memref<1x16x192xbf16, #tpu.memory_space<vmem>>, vector<1x16x192xbf16>
    %1 = vector.extract_strided_slice %0 {offsets = [0, 0, 0], sizes = [1, 16, 64], strides = [1, 1, 1]} : vector<1x16x192xbf16> to vector<1x16x64xbf16>
    %2 = vector.extract_strided_slice %0 {offsets = [0, 0, 64], sizes = [1, 16, 64], strides = [1, 1, 1]} : vector<1x16x192xbf16> to vector<1x16x64xbf16>
    %3 = vector.extract_strided_slice %0 {offsets = [0, 0, 128], sizes = [1, 16, 64], strides = [1, 1, 1]} : vector<1x16x192xbf16> to vector<1x16x64xbf16>
    "tpu.trace_start"() <{level = 10 : i32, message = "bsf,btf->bst"}> : () -> ()
    %cst = arith.constant dense<0.000000e+00> : vector<1x16x16xf32>
    %4 = tpu.matmul %1, %2, %cst {dimension_numbers = #tpu.dot_dimension_numbers<[2], [2], [1], [1], [0, 0, 0, 1, 1, 1], [0], [0]>} : vector<1x16x64xbf16>, vector<1x16x64xbf16>, vector<1x16x16xf32> -> vector<1x16x16xf32>
    "tpu.trace_stop"() : () -> ()
    %cst_2 = arith.constant dense<0xFF800000> : vector<1x16xf32>
    %5 = vector.multi_reduction <maximumf>, %4, %cst_2 [2] : vector<1x16x16xf32> to vector<1x16xf32>
    %6 = vector.shape_cast %5 : vector<1x16xf32> to vector<1x16x1xf32>
    %7 = vector.broadcast %6 : vector<1x16x1xf32> to vector<1x16x16xf32>
    %8 = arith.subf %4, %7 : vector<1x16x16xf32>
    %9 = math.exp %8 : vector<1x16x16xf32>
    %cst_3 = arith.constant dense<0.000000e+00> : vector<1x16xf32>
    %10 = vector.multi_reduction <add>, %9, %cst_3 [2] : vector<1x16x16xf32> to vector<1x16xf32>
    %11 = vector.shape_cast %10 : vector<1x16xf32> to vector<1x16x1xf32>
    %12 = arith.truncf %9 : vector<1x16x16xf32> to vector<1x16x16xbf16>
    "tpu.trace_start"() <{level = 10 : i32, message = "bst,btf->bsf"}> : () -> ()
    %cst_4 = arith.constant dense<0.000000e+00> : vector<1x16x64xf32>
    %13 = tpu.matmul %12, %3, %cst_4 {dimension_numbers = #tpu.dot_dimension_numbers<[2], [1], [1], [2], [0, 0, 0, 1, 1, 2], [0], [0]>} : vector<1x16x16xbf16>, vector<1x16x64xbf16>, vector<1x16x64xf32> -> vector<1x16x64xf32>
    "tpu.trace_stop"() : () -> ()
    %14 = tpu.reciprocal %11 {approx = true} : vector<1x16x1xf32> -> vector<1x16x1xf32>
    %15 = vector.broadcast %14 : vector<1x16x1xf32> to vector<1x16x64xf32>
    %16 = arith.mulf %13, %15 : vector<1x16x64xf32>
    %17 = arith.truncf %16 : vector<1x16x64xf32> to vector<1x16x64xbf16>
    %c0_5 = arith.constant 0 : index
    %c0_6 = arith.constant 0 : index
    %c0_7 = arith.constant 0 : index
    %18 = vector.load %arg2[%c0_5, %c0_6, %c0_7] : memref<1x16x64xbf16, #tpu.memory_space<vmem>>, vector<1x16x64xbf16>
    tpu.vector_store %arg2[%c0_5, %c0_6, %c0_7], %17 {strides = array<i32>} : memref<1x16x64xbf16, #tpu.memory_space<vmem>>, vector<1x16x64xbf16>,
    return
  }
  func.func @transform_0(%arg0: i32) -> (i32, i32, i32) {
    %c0_i32 = arith.constant 0 : i32
    %c0_i32_0 = arith.constant 0 : i32
    %c0_i32_1 = arith.constant 0 : i32
    return %arg0, %c0_i32, %c0_i32_0 : i32, i32, i32
  }
  func.func @transform_1(%arg0: i32) -> (i32, i32, i32) {
    %c0_i32 = arith.constant 0 : i32
    %c0_i32_0 = arith.constant 0 : i32
    %c0_i32_1 = arith.constant 0 : i32
    return %arg0, %c0_i32, %c0_i32_0 : i32, i32, i32
  }
}

module attributes {stable_mosaic.version = 11 : i64} {
  func.func @conv3x3_bn_lrelu_kernel(%arg0: i32, %arg1: memref<1x4x256xbf16, #tpu.memory_space<vmem>>, %arg2: memref<4x36xbf16, #tpu.memory_space<vmem>>, %arg3: memref<4x1xf32, #tpu.memory_space<vmem>>, %arg4: memref<9x256xbf16, #tpu.memory_space<vmem>>, %arg5: memref<1x4x256xf32, #tpu.memory_space<vmem>>) attributes {dimension_semantics = [#tpu.dimension_semantics<parallel>], iteration_bounds = array<i64: 2>, scalar_prefetch = 0 : i64, scratch_operands = 0 : i64, tpu.core_type = #tpu.core_type<tc>, window_params = [{transform_indices = @transform_0, window_bounds = array<i64: 1, 4, 256>}, {pipeline_mode = #tpu.pipeline_mode<synchronous>, transform_indices = @transform_1, window_bounds = array<i64: 4, 36>}, {pipeline_mode = #tpu.pipeline_mode<synchronous>, transform_indices = @transform_2, window_bounds = array<i64: 4, 1>}, {pipeline_mode = #tpu.pipeline_mode<synchronous>, transform_indices = @transform_3, window_bounds = array<i64: 9, 256>}, {transform_indices = @transform_4, window_bounds = array<i64: 1, 4, 256>}]} {
    %c0 = arith.constant 0 : index
    %c0_0 = arith.constant 0 : index
    %c0_1 = arith.constant 0 : index
    %0 = vector.load %arg1[%c0, %c0_0, %c0_1] : memref<1x4x256xbf16, #tpu.memory_space<vmem>>, vector<1x4x256xbf16>
    %1 = vector.shape_cast %0 : vector<1x4x256xbf16> to vector<4x256xbf16>
    %2 = vector.extract_strided_slice %1 {offsets = [0, 239], sizes = [4, 17], strides = [1, 1]} : vector<4x256xbf16> to vector<4x17xbf16>
    %3 = vector.extract_strided_slice %1 {offsets = [0, 0], sizes = [4, 239], strides = [1, 1]} : vector<4x256xbf16> to vector<4x239xbf16>
    %4 = tpu.concatenate %2, %3 in 1 : vector<4x17xbf16>, vector<4x239xbf16> -> vector<4x256xbf16>
    %c0_2 = arith.constant 0 : index
    %c0_3 = arith.constant 0 : index
    %5 = vector.load %arg4[%c0_2, %c0_3] : memref<9x256xbf16, #tpu.memory_space<vmem>>, vector<1x256xbf16>
    %6 = vector.broadcast %5 : vector<1x256xbf16> to vector<4x256xbf16>
    %7 = arith.mulf %4, %6 : vector<4x256xbf16>
    %8 = vector.extract_strided_slice %1 {offsets = [0, 240], sizes = [4, 16], strides = [1, 1]} : vector<4x256xbf16> to vector<4x16xbf16>
    %9 = vector.extract_strided_slice %1 {offsets = [0, 0], sizes = [4, 240], strides = [1, 1]} : vector<4x256xbf16> to vector<4x240xbf16>
    %10 = tpu.concatenate %8, %9 in 1 : vector<4x16xbf16>, vector<4x240xbf16> -> vector<4x256xbf16>
    %c1 = arith.constant 1 : index
    %c0_4 = arith.constant 0 : index
    %11 = vector.load %arg4[%c1, %c0_4] : memref<9x256xbf16, #tpu.memory_space<vmem>>, vector<1x256xbf16>
    %12 = vector.broadcast %11 : vector<1x256xbf16> to vector<4x256xbf16>
    %13 = arith.mulf %10, %12 : vector<4x256xbf16>
    %14 = vector.extract_strided_slice %1 {offsets = [0, 241], sizes = [4, 15], strides = [1, 1]} : vector<4x256xbf16> to vector<4x15xbf16>
    %15 = vector.extract_strided_slice %1 {offsets = [0, 0], sizes = [4, 241], strides = [1, 1]} : vector<4x256xbf16> to vector<4x241xbf16>
    %16 = tpu.concatenate %14, %15 in 1 : vector<4x15xbf16>, vector<4x241xbf16> -> vector<4x256xbf16>
    %c2 = arith.constant 2 : index
    %c0_5 = arith.constant 0 : index
    %17 = vector.load %arg4[%c2, %c0_5] : memref<9x256xbf16, #tpu.memory_space<vmem>>, vector<1x256xbf16>
    %18 = vector.broadcast %17 : vector<1x256xbf16> to vector<4x256xbf16>
    %19 = arith.mulf %16, %18 : vector<4x256xbf16>
    %20 = vector.extract_strided_slice %1 {offsets = [0, 255], sizes = [4, 1], strides = [1, 1]} : vector<4x256xbf16> to vector<4x1xbf16>
    %21 = vector.extract_strided_slice %1 {offsets = [0, 0], sizes = [4, 255], strides = [1, 1]} : vector<4x256xbf16> to vector<4x255xbf16>
    %22 = tpu.concatenate %20, %21 in 1 : vector<4x1xbf16>, vector<4x255xbf16> -> vector<4x256xbf16>
    %c3 = arith.constant 3 : index
    %c0_6 = arith.constant 0 : index
    %23 = vector.load %arg4[%c3, %c0_6] : memref<9x256xbf16, #tpu.memory_space<vmem>>, vector<1x256xbf16>
    %24 = vector.broadcast %23 : vector<1x256xbf16> to vector<4x256xbf16>
    %25 = arith.mulf %22, %24 : vector<4x256xbf16>
    %c4 = arith.constant 4 : index
    %c0_7 = arith.constant 0 : index
    %26 = vector.load %arg4[%c4, %c0_7] : memref<9x256xbf16, #tpu.memory_space<vmem>>, vector<1x256xbf16>
    %27 = vector.broadcast %26 : vector<1x256xbf16> to vector<4x256xbf16>
    %28 = arith.mulf %1, %27 : vector<4x256xbf16>
    %29 = vector.extract_strided_slice %1 {offsets = [0, 1], sizes = [4, 255], strides = [1, 1]} : vector<4x256xbf16> to vector<4x255xbf16>
    %30 = vector.extract_strided_slice %1 {offsets = [0, 0], sizes = [4, 1], strides = [1, 1]} : vector<4x256xbf16> to vector<4x1xbf16>
    %31 = tpu.concatenate %29, %30 in 1 : vector<4x255xbf16>, vector<4x1xbf16> -> vector<4x256xbf16>
    %c5 = arith.constant 5 : index
    %c0_8 = arith.constant 0 : index
    %32 = vector.load %arg4[%c5, %c0_8] : memref<9x256xbf16, #tpu.memory_space<vmem>>, vector<1x256xbf16>
    %33 = vector.broadcast %32 : vector<1x256xbf16> to vector<4x256xbf16>
    %34 = arith.mulf %31, %33 : vector<4x256xbf16>
    %35 = vector.extract_strided_slice %1 {offsets = [0, 15], sizes = [4, 241], strides = [1, 1]} : vector<4x256xbf16> to vector<4x241xbf16>
    %36 = vector.extract_strided_slice %1 {offsets = [0, 0], sizes = [4, 15], strides = [1, 1]} : vector<4x256xbf16> to vector<4x15xbf16>
    %37 = tpu.concatenate %35, %36 in 1 : vector<4x241xbf16>, vector<4x15xbf16> -> vector<4x256xbf16>
    %c6 = arith.constant 6 : index
    %c0_9 = arith.constant 0 : index
    %38 = vector.load %arg4[%c6, %c0_9] : memref<9x256xbf16, #tpu.memory_space<vmem>>, vector<1x256xbf16>
    %39 = vector.broadcast %38 : vector<1x256xbf16> to vector<4x256xbf16>
    %40 = arith.mulf %37, %39 : vector<4x256xbf16>
    %41 = vector.extract_strided_slice %1 {offsets = [0, 16], sizes = [4, 240], strides = [1, 1]} : vector<4x256xbf16> to vector<4x240xbf16>
    %42 = vector.extract_strided_slice %1 {offsets = [0, 0], sizes = [4, 16], strides = [1, 1]} : vector<4x256xbf16> to vector<4x16xbf16>
    %43 = tpu.concatenate %41, %42 in 1 : vector<4x240xbf16>, vector<4x16xbf16> -> vector<4x256xbf16>
    %c7 = arith.constant 7 : index
    %c0_10 = arith.constant 0 : index
    %44 = vector.load %arg4[%c7, %c0_10] : memref<9x256xbf16, #tpu.memory_space<vmem>>, vector<1x256xbf16>
    %45 = vector.broadcast %44 : vector<1x256xbf16> to vector<4x256xbf16>
    %46 = arith.mulf %43, %45 : vector<4x256xbf16>
    %47 = vector.extract_strided_slice %1 {offsets = [0, 17], sizes = [4, 239], strides = [1, 1]} : vector<4x256xbf16> to vector<4x239xbf16>
    %48 = vector.extract_strided_slice %1 {offsets = [0, 0], sizes = [4, 17], strides = [1, 1]} : vector<4x256xbf16> to vector<4x17xbf16>
    %49 = tpu.concatenate %47, %48 in 1 : vector<4x239xbf16>, vector<4x17xbf16> -> vector<4x256xbf16>
    %c8 = arith.constant 8 : index
    %c0_11 = arith.constant 0 : index
    %50 = vector.load %arg4[%c8, %c0_11] : memref<9x256xbf16, #tpu.memory_space<vmem>>, vector<1x256xbf16>
    %51 = vector.broadcast %50 : vector<1x256xbf16> to vector<4x256xbf16>
    %52 = arith.mulf %49, %51 : vector<4x256xbf16>
    %53 = tpu.concatenate %7, %13, %19, %25, %28, %34, %40, %46, %52 in 0 : vector<4x256xbf16>, vector<4x256xbf16>, vector<4x256xbf16>, vector<4x256xbf16>, vector<4x256xbf16>, vector<4x256xbf16>, vector<4x256xbf16>, vector<4x256xbf16>, vector<4x256xbf16> -> vector<36x256xbf16>
    %c0_12 = arith.constant 0 : index
    %c0_13 = arith.constant 0 : index
    %54 = vector.load %arg2[%c0_12, %c0_13] : memref<4x36xbf16, #tpu.memory_space<vmem>>, vector<4x36xbf16>
    %cst = arith.constant dense<0.000000e+00> : vector<4x256xf32>
    %55 = tpu.matmul %54, %53, %cst {dimension_numbers = #tpu.dot_dimension_numbers<[1], [0], [0], [1], [0, 0, 1, 1], [], []>} : vector<4x36xbf16>, vector<36x256xbf16>, vector<4x256xf32> -> vector<4x256xf32>
    %c0_14 = arith.constant 0 : index
    %c0_15 = arith.constant 0 : index
    %56 = vector.load %arg3[%c0_14, %c0_15] : memref<4x1xf32, #tpu.memory_space<vmem>>, vector<4x1xf32>
    %57 = vector.broadcast %56 : vector<4x1xf32> to vector<4x256xf32>
    %58 = arith.addf %55, %57 : vector<4x256xf32>
    %cst_16 = arith.constant 0.000000e+00 : f32
    %59 = vector.broadcast %cst_16 : f32 to vector<4x256xf32>
    %60 = arith.cmpf oge, %58, %59 : vector<4x256xf32>
    %cst_17 = arith.constant 2.000000e-01 : f32
    %61 = vector.broadcast %cst_17 : f32 to vector<4x256xf32>
    %62 = arith.mulf %61, %58 : vector<4x256xf32>
    %63 = arith.select %60, %58, %62 : vector<4x256xi1>, vector<4x256xf32>
    %c0_18 = arith.constant 0 : index
    %c0_19 = arith.constant 0 : index
    %c0_20 = arith.constant 0 : index
    %64 = vector.load %arg5[%c0_18, %c0_19, %c0_20] : memref<1x4x256xf32, #tpu.memory_space<vmem>>, vector<1x4x256xf32>
    %65 = vector.shape_cast %64 : vector<1x4x256xf32> to vector<4x256xf32>
    %66 = vector.shape_cast %63 : vector<4x256xf32> to vector<1x4x256xf32>
    tpu.vector_store %arg5[%c0_18, %c0_19, %c0_20], %66 {strides = array<i32>} : memref<1x4x256xf32, #tpu.memory_space<vmem>>, vector<1x4x256xf32>,
    return
  }
  func.func @transform_0(%arg0: i32) -> (i32, i32, i32) {
    %c0_i32 = arith.constant 0 : i32
    %c0_i32_0 = arith.constant 0 : i32
    %c0_i32_1 = arith.constant 0 : i32
    return %arg0, %c0_i32, %c0_i32_0 : i32, i32, i32
  }
  func.func @transform_1(%arg0: i32) -> (i32, i32) {
    %c0_i32 = arith.constant 0 : i32
    %c0_i32_0 = arith.constant 0 : i32
    %c0_i32_1 = arith.constant 0 : i32
    return %c0_i32, %c0_i32_0 : i32, i32
  }
  func.func @transform_2(%arg0: i32) -> (i32, i32) {
    %c0_i32 = arith.constant 0 : i32
    %c0_i32_0 = arith.constant 0 : i32
    %c0_i32_1 = arith.constant 0 : i32
    return %c0_i32, %c0_i32_0 : i32, i32
  }
  func.func @transform_3(%arg0: i32) -> (i32, i32) {
    %c0_i32 = arith.constant 0 : i32
    %c0_i32_0 = arith.constant 0 : i32
    %c0_i32_1 = arith.constant 0 : i32
    return %c0_i32, %c0_i32_0 : i32, i32
  }
  func.func @transform_4(%arg0: i32) -> (i32, i32, i32) {
    %c0_i32 = arith.constant 0 : i32
    %c0_i32_0 = arith.constant 0 : i32
    %c0_i32_1 = arith.constant 0 : i32
    return %arg0, %c0_i32, %c0_i32_0 : i32, i32, i32
  }
}

</mosaic_0001>

<llo_original>
// kernel: multi_scale_attention.3
$region0: #{multi_scale_attention.3}
  #allocation0 [shape = 'u32[]', space=smem, size = 0x4, offset = 0x4, fixed_abs, tag = 'smem constant byte address 0x4 - core index']
  #allocation1 [shape = 'u32[72,128]{1,0:T(1,128)}', space=vmem, size = 0x9000, scoped, tag = 'internal scratch']
  %s0 = inlined_call_operand.vmem [shape: f32[2,4,256], index: 0, kind: input, shape index: {}]
  %s1 = inlined_call_operand.vmem [shape: bf16[12,4], index: 1, kind: input, shape index: {}]
  %s2 = inlined_call_operand.vmem [shape: f32[12,1], index: 2, kind: input, shape index: {}]
  %s3 = inlined_call_operand.vmem [shape: bf16[2,12,256], index: 3, kind: output, shape index: {}]
  %s4 = sld [smem:[#allocation0]]
  $region45: #{multi_scale_attention.3} parent=0
    _
  %s6 = ssub.s32 1, %s4
  %s7 = scalar_select 0, %s6, %s4
  loop: start=0, step=1, limit=4
  $region2: #{multi_scale_attention.3} parent=0 // loop_pre_header
    _
  $region3: #{multi_scale_attention.3} parent=0 // loop_header
    %s9 = sphi 0, %s13
    %p10 = scmp.ge.s32.totalorder %s9, 4
    %s16 = sphi 0, %s28
    %s17 = sphi 0, %s24
    %s18 = sphi 0, %s16
    %s19 = sphi 0, %s17
    %s20 = sphi 0, %s18
    %s21 = sphi 0, %s19
    %s33 = sphi 0, %s35
    %s36 = sphi 0, %s33
    %s37 = sphi 0, %s36
    %s53 = sphi 0, %s37
    %s57 = sphi 0, %s57
    %s59 = sphi 0, %s57
    %s60 = sphi 0, %s59
    %s74 = sphi 0, %s60
    %s78 = sphi 0, %s78
    %s80 = sphi 0, %s78
    %s81 = sphi 0, %s80
    %s95 = sphi 0, %s81
    %s103 = sphi 0, %s105
    %s106 = sphi 0, %s103
    %s107 = sphi 0, %s106
    %s123 = sphi 0, %s107
  $region4: #{multi_scale_attention.3} parent=0 // loop_header_branch
    %12 = sbr.rel (%p10) target = $region8
  $region5: #{multi_scale_attention.3} parent=0 // loop_body
    %s14 = ssub.s32 %s9, 1
    %s15 = ssub.s32 %s9, 2
    %s22 = sadd.s32 1, %s17
    %p23 = scmp.ge.s32.totalorder %s22, 1
    %s24 = scalar_select %p23, 0, %s22
    %s25 = sadd.s32 1, %s16
    %s26 = scalar_select %p23, %s25, %s16
    %p27 = scmp.ge.s32.totalorder %s26, 2
    %s28 = scalar_select %p27, 0, %s26
    %s29 = ssub.s32 %s16, %s28
    %s30 = ssub.s32 %s17, %s24
    %s31 = sor.u32 %s29, %s30
    %p32 = scmp.eq.s32.totalorder %s31, 0
    %s34 = sadd.s32 %s33, 1
    %s35 = scalar_select %p32, %s33, %s34
    %p38 = pneg %p32
    %p39 = scmp.eq.s32.totalorder %s9, 1
    %p40 = por %p38, %p39
    %p41 = scmp.ne.s32.totalorder %s33, %s36
    %p42 = scmp.eq.s32.totalorder %s9, 0
    %p43 = por %p41, %p42
    %p44 = scmp.ne.s32.totalorder %s33, %s36
    %p45 = scmp.eq.s32.totalorder %s14, 1
    %p46 = por %p44, %p45
    %p47 = scmp.ne.s32.totalorder %s36, %s37
    %p48 = scmp.eq.s32.totalorder %s14, 0
    %p49 = por %p47, %p48
    %p50 = scmp.ne.s32.totalorder %s36, %s37
    %p51 = scmp.eq.s32.totalorder %s15, 1
    %p52 = por %p50, %p51
    %p54 = scmp.ne.s32.totalorder %s37, %s53
    %p55 = scmp.eq.s32.totalorder %s15, 0
    %p56 = por %p54, %p55
    %s58 = sadd.s32 %s57, 1
    %p61 = scmp.eq.s32.totalorder %s9, 1
    %p62 = scmp.ne.s32.totalorder %s57, %s59
    %p63 = scmp.eq.s32.totalorder %s9, 0
    %p64 = por %p62, %p63
    %p65 = scmp.ne.s32.totalorder %s57, %s59
    %p66 = scmp.eq.s32.totalorder %s14, 1
    %p67 = por %p65, %p66
    %p68 = scmp.ne.s32.totalorder %s59, %s60
    %p69 = scmp.eq.s32.totalorder %s14, 0
    %p70 = por %p68, %p69
    %p71 = scmp.ne.s32.totalorder %s59, %s60
    %p72 = scmp.eq.s32.totalorder %s15, 1
    %p73 = por %p71, %p72
    %p75 = scmp.ne.s32.totalorder %s60, %s74
    %p76 = scmp.eq.s32.totalorder %s15, 0
    %p77 = por %p75, %p76
    %s79 = sadd.s32 %s78, 1
    %p82 = scmp.eq.s32.totalorder %s9, 1
    %p83 = scmp.ne.s32.totalorder %s78, %s80
    %p84 = scmp.eq.s32.totalorder %s9, 0
    %p85 = por %p83, %p84
    %p86 = scmp.ne.s32.totalorder %s78, %s80
    %p87 = scmp.eq.s32.totalorder %s14, 1
    %p88 = por %p86, %p87
    %p89 = scmp.ne.s32.totalorder %s80, %s81
    %p90 = scmp.eq.s32.totalorder %s14, 0
    %p91 = por %p89, %p90
    %p92 = scmp.ne.s32.totalorder %s80, %s81
    %p93 = scmp.eq.s32.totalorder %s15, 1
    %p94 = por %p92, %p93
    %p96 = scmp.ne.s32.totalorder %s81, %s95
    %p97 = scmp.eq.s32.totalorder %s15, 0
    %p98 = por %p96, %p97
    %s99 = ssub.s32 %s16, %s28
    %s100 = ssub.s32 %s17, %s24
    %s101 = sor.u32 %s99, %s100
    %p102 = scmp.eq.s32.totalorder %s101, 0
    %s104 = sadd.s32 %s103, 1
    %s105 = scalar_select %p102, %s103, %s104
    %p108 = pneg %p102
    %p109 = scmp.eq.s32.totalorder %s9, 1
    %p110 = por %p108, %p109
    %p111 = scmp.ne.s32.totalorder %s103, %s106
    %p112 = scmp.eq.s32.totalorder %s9, 0
    %p113 = por %p111, %p112
    %p114 = scmp.ne.s32.totalorder %s103, %s106
    %p115 = scmp.eq.s32.totalorder %s14, 1
    %p116 = por %p114, %p115
    %p117 = scmp.ne.s32.totalorder %s106, %s107
    %p118 = scmp.eq.s32.totalorder %s14, 0
    %p119 = por %p117, %p118
    %p120 = scmp.ne.s32.totalorder %s106, %s107
    %p121 = scmp.eq.s32.totalorder %s15, 1
    %p122 = por %p120, %p121
    %p124 = scmp.ne.s32.totalorder %s107, %s123
    %p125 = scmp.eq.s32.totalorder %s15, 0
    %p126 = por %p124, %p125
    %p127 = scmp.le.s32.totalorder 1, %s9
    %p128 = scmp.lt.s32.totalorder %s9, 3
    %p129 = pnand %p127, %p128
    %p130 = pneg %p129
    // Predicated region
    $region9: #{multi_scale_attention.3} parent=5 // pred_check
      _
    $region10: #{multi_scale_attention.3} parent=5 // pred_check_branch
      %132 = sbr.rel (%p129) target = $region12
    $region11: #{multi_scale_attention.3} parent=5 // pred_region
      %s133 = ssub.s32 %s9, 1
      // Predicated region
      $region13: #{multi_scale_attention.3} parent=11 // pred_check
        %p134 = pneg %p70
      $region14: #{multi_scale_attention.3} parent=11 // pred_check_branch
        %136 = sbr.rel (%p134) target = $region16
      $region15: #{multi_scale_attention.3} parent=11 // pred_region
        _
      $region16: #{multi_scale_attention.3} parent=11 // pred_fallthru
        _
      // Predicated region
      $region17: #{multi_scale_attention.3} parent=11 // pred_check
        %p137 = pneg %p91
      $region18: #{multi_scale_attention.3} parent=11 // pred_check_branch
        %139 = sbr.rel (%p137) target = $region20
      $region19: #{multi_scale_attention.3} parent=11 // pred_region
        _
      $region20: #{multi_scale_attention.3} parent=11 // pred_fallthru
        _
    $region12: #{multi_scale_attention.3} parent=5 // pred_fallthru
      _
    %p140 = scmp.lt.s32.totalorder %s9, 2
    // Predicated region
    $region21: #{multi_scale_attention.3} parent=5 // pred_check
      %p141 = pneg %p140
    $region22: #{multi_scale_attention.3} parent=5 // pred_check_branch
      %143 = sbr.rel (%p141) target = $region24
    $region23: #{multi_scale_attention.3} parent=5 // pred_region
      // Predicated region
      $region25: #{multi_scale_attention.3} parent=23 // pred_check
        %p144 = pneg %p43
      $region26: #{multi_scale_attention.3} parent=23 // pred_check_branch
        %146 = sbr.rel (%p144) target = $region28
      $region27: #{multi_scale_attention.3} parent=23 // pred_region
        %s147 = smul.u32 2, %s17
        %p148 = scmp.lt.s32.totalorder %s16, 1
        %s149 = scalar_select %p148, %s16, 1
        %p150 = scmp.lt.s32.totalorder %s147, 1
        %s151 = scalar_select %p150, %s147, 1
        %s152 = smul.addr %s149, 2
        %s153 = sadd.s32 %s151, %s152
        %s154 = smul.addr %s153, 4
        %s155 = scalar_lea.vmem %s0, %s154
        %s156 = smul.u32 2, %s17
      $region28: #{multi_scale_attention.3} parent=23 // pred_fallthru
        _
    $region24: #{multi_scale_attention.3} parent=5 // pred_fallthru
      _
    %p157 = scmp.le.s32.totalorder 1, %s9
    %p158 = scmp.lt.s32.totalorder %s9, 3
    %p159 = pnand %p157, %p158
    %p160 = pneg %p159
    // Predicated region
    $region29: #{multi_scale_attention.3} parent=5 // pred_check
      _
    $region30: #{multi_scale_attention.3} parent=5 // pred_check_branch
      %162 = sbr.rel (%p159) target = $region32
    $region31: #{multi_scale_attention.3} parent=5 // pred_region
      %s163 = ssub.s32 %s9, 1
      %s164 = smul.u32 2, %s19
      %p165 = scmp.lt.s32.totalorder %s18, 1
      %s166 = scalar_select %p165, %s18, 1
      %p167 = scmp.lt.s32.totalorder %s164, 1
      %s168 = scalar_select %p167, %s164, 1
      %s169 = smul.addr %s166, 2
      %s170 = sadd.s32 %s168, %s169
      %s171 = smul.addr %s170, 4
      %s172 = scalar_lea.vmem %s0, %s171
      %p173 = pneg %p49
      %p174 = pneg %p46
      %p175 = pneg %p70
      %p176 = pneg %p67
      %p177 = pneg %p91
      %p178 = pneg %p88
      %p179 = pneg %p119
      %p180 = pneg %p116
      %s181 = smul.u32 2, %s19
      %p182 = scmp.lt.s32.totalorder %s18, 1
      %s183 = scalar_select %p182, %s18, 1
      %p184 = scmp.lt.s32.totalorder %s181, 1
      %s185 = scalar_select %p184, %s181, 1
      %s186 = smul.addr %s183, 4
      %s187 = sadd.s32 %s185, %s186
      %s188 = smul.addr %s187, 4
      %s189 = scalar_lea.vmem %s3, %s188
      %s190 = smul.u32 2, %s19
      %p191 = scmp.lt.s32.totalorder %s18, 1
      %s192 = scalar_select %p191, %s18, 1
      %p193 = scmp.lt.s32.totalorder %s190, 1
      %s194 = scalar_select %p193, %s190, 1
      %s195 = smul.addr %s192, 2
      %s196 = sadd.s32 %s194, %s195
      %s197 = smul.addr %s196, 4
      %s198 = scalar_lea.vmem %s0, %s197
      %s199 = smul.u32 2, %s19
      %s200 = smul.u32 2, %s19
      %p201 = scmp.lt.s32.totalorder %s18, 1
      %s202 = scalar_select %p201, %s18, 1
      %p203 = scmp.lt.s32.totalorder %s200, 1
      %s204 = scalar_select %p203, %s200, 1
      %s205 = smul.addr %s202, 4
      %s206 = sadd.s32 %s204, %s205
      %s207 = smul.addr %s206, 4
      %s208 = scalar_lea.vmem %s3, %s207
      %s209 = smul.u32 2, %s19
      %v211 = vld [vmem:[%s198] sm:$0xff]
      %213 = vst [vmem:[#allocation1] ss:$2 sm:$0xff] %v211
      %v214 = vld.sshfl [vmem:[#allocation1] sm:$0xff pattern:$0x75316420]
      %v215 = vld.sshfl [vmem:[#allocation1 + $0x8] sm:$0xff pattern:$0x75316420]
      %v218 = vpack.c.bf16 %v214, %v214
      %v219 = vpack.c.bf16 %v215, %v215
      %v220 = vld [vmem:[%s1] sm:$0xf]
      %v221 = vld [vmem:[%s1 + $0x4] sm:$0x3]
      %v222 = vld [vmem:[%s2] sm:$0xff]
      %v223 = vld [vmem:[%s2 + $0x8] sm:$0xf]
      %225 = vset.pattern.permute.xlu0 0
      %226 = vperm.xlu0 %225, %v222
      %v227 = vpop.permute.xlu0 %226
      %230 = vset.pattern.permute.xlu0 0
      %231 = vperm.xlu0 %230, %v223
      %v232 = vpop.permute.xlu0 %231
      %v236 = vunpack.c.l.b16 %v220
      %v237 = vunpack.c.l.b16 %v221
      %v238 = vpack.c.b16 %v237, %v236
      %vm239 = vcmask 31744
      %v241 = vsel %vm239, %v238, 0
      %vm243 = vcmask 1041408
      %v245 = vsel %vm243, %v218, 0
      %v248 = vsel %vm243, %v219, 0
      %250 = vmatpush.bf16.msra.mxu0 0
      %251 = vmatpush.bf16.msra.mxu0 0
      %252 = vmatpush.bf16.msra.mxu0 0
      %253 = vmatpush.bf16.msra.mxu0 0
      %254 = vmatpush.bf16.msra.mxu0 0
      %255 = vmatpush.bf16.msra.mxu0 0
      %256 = vmatpush.bf16.msra.mxu0 0
      %257 = vmatpush.bf16.msra.mxu0 %v245
      %258 = vmatmul.bf16.gmra.mxu0 %v241
      %v259 = vpop.f32.mrf.mxu0
      %v260 = vadd.f32 %v227, %v259
      %v261 = vpop.f32.mrf.mxu0
      %v262 = vadd.f32 %v232, %v261
      %263 = vdwg.mxu0
      %264 = vmatpush.bf16.msra.mxu0 0
      %265 = vmatpush.bf16.msra.mxu0 0
      %266 = vmatpush.bf16.msra.mxu0 0
      %267 = vmatpush.bf16.msra.mxu0 0
      %268 = vmatpush.bf16.msra.mxu0 0
      %269 = vmatpush.bf16.msra.mxu0 0
      %270 = vmatpush.bf16.msra.mxu0 0
      %271 = vmatpush.bf16.msra.mxu0 %v248
      %272 = vmatmul.bf16.gmra.mxu0 %v241
      %v273 = vpop.f32.mrf.mxu0
      %v274 = vadd.f32 %v227, %v273
      %v275 = vpop.f32.mrf.mxu0
      %v276 = vadd.f32 %v232, %v275
      %277 = vdwg.mxu0
      %v278 = vpack.c.bf16 %v274, %v260
      %v279 = vpack.c.bf16 %v276, %v262
      %280 = vst [vmem:[%s208] sm:$0xff] %v278
      %281 = vst [vmem:[%s208 + $0x8] sm:$0x33] %v279
      %s282 = smul.u32 2, %s19
      %p283 = scmp.lt.s32.totalorder %s18, 1
      %s284 = scalar_select %p283, %s18, 1
      %p285 = scmp.lt.s32.totalorder %s282, 1
      %s286 = scalar_select %p285, %s282, 1
      %s287 = smul.addr %s284, 4
      %s288 = sadd.s32 %s286, %s287
      %s289 = smul.addr %s288, 4
      %s290 = scalar_lea.vmem %s3, %s289
      // Predicated region
      $region33: #{multi_scale_attention.3} parent=31 // pred_check
        %p291 = pneg %p116
      $region34: #{multi_scale_attention.3} parent=31 // pred_check_branch
        %293 = sbr.rel (%p291) target = $region36
      $region35: #{multi_scale_attention.3} parent=31 // pred_region
        %s294 = smul.u32 2, %s19
      $region36: #{multi_scale_attention.3} parent=31 // pred_fallthru
        _
    $region32: #{multi_scale_attention.3} parent=5 // pred_fallthru
      _
    %p295 = scmp.le.s32.totalorder 2, %s9
    // Predicated region
    $region37: #{multi_scale_attention.3} parent=5 // pred_check
      %p296 = pneg %p295
    $region38: #{multi_scale_attention.3} parent=5 // pred_check_branch
      %298 = sbr.rel (%p296) target = $region40
    $region39: #{multi_scale_attention.3} parent=5 // pred_region
      %s299 = ssub.s32 %s9, 2
      // Predicated region
      $region41: #{multi_scale_attention.3} parent=39 // pred_check
        %p300 = pneg %p122
      $region42: #{multi_scale_attention.3} parent=39 // pred_check_branch
        %302 = sbr.rel (%p300) target = $region44
      $region43: #{multi_scale_attention.3} parent=39 // pred_region
        %s303 = smul.u32 2, %s21
        %p304 = scmp.lt.s32.totalorder %s20, 1
        %s305 = scalar_select %p304, %s20, 1
        %p306 = scmp.lt.s32.totalorder %s303, 1
        %s307 = scalar_select %p306, %s303, 1
        %s308 = smul.addr %s305, 4
        %s309 = sadd.s32 %s307, %s308
        %s310 = smul.addr %s309, 4
        %s311 = scalar_lea.vmem %s3, %s310
      $region44: #{multi_scale_attention.3} parent=39 // pred_fallthru
        _
    $region40: #{multi_scale_attention.3} parent=5 // pred_fallthru
      _
  $region6: #{multi_scale_attention.3} parent=0 // loop_footer
    %s13 = sadd.s32 1, %s9
  $region7: #{multi_scale_attention.3} parent=0 // loop_footer_branch
    %8 = sbr.rel target = $region3
  $region8: #{multi_scale_attention.3} parent=0 // loop_exit
    _

// kernel: multi_scale_attention.4
$region0: #{multi_scale_attention.4}
  #allocation0 [shape = 'u32[]', space=smem, size = 0x4, offset = 0x4, fixed_abs, tag = 'smem constant byte address 0x4 - core index']
  #allocation1 [shape = 'u32[72,128]{1,0:T(1,128)}', space=vmem, size = 0x9000, scoped, tag = 'internal scratch']
  %s0 = inlined_call_operand.vmem [shape: bf16[2,16,192], index: 0, kind: input, shape index: {}]
  %s1 = inlined_call_operand.vmem [shape: bf16[2,16,64], index: 1, kind: output, shape index: {}]
  %s2 = sld [smem:[#allocation0]]
  $region37: #{multi_scale_attention.4} parent=0
    _
  %s4 = ssub.s32 1, %s2
  %s5 = scalar_select 0, %s4, %s2
  loop: start=0, step=1, limit=4
  $region2: #{multi_scale_attention.4} parent=0 // loop_pre_header
    _
  $region3: #{multi_scale_attention.4} parent=0 // loop_header
    %s7 = sphi 0, %s11
    %p8 = scmp.ge.s32.totalorder %s7, 4
    %s17 = sphi 0, %s19
    %s20 = sphi 0, %s17
    %s21 = sphi 0, %s20
    %s37 = sphi 0, %s21
    %s43 = sphi 0, %s45
    %s46 = sphi 0, %s43
    %s47 = sphi 0, %s46
    %s63 = sphi 0, %s47
  $region4: #{multi_scale_attention.4} parent=0 // loop_header_branch
    %10 = sbr.rel (%p8) target = $region8
  $region5: #{multi_scale_attention.4} parent=0 // loop_body
    %s12 = ssub.s32 %s7, 1
    %s13 = ssub.s32 %s7, 2
    %s14 = sadd.s32 %s7, 1
    %s15 = ssub.s32 %s7, %s14
    %p16 = scmp.eq.s32.totalorder %s15, 0
    %s18 = sadd.s32 %s17, 1
    %s19 = scalar_select %p16, %s17, %s18
    %p22 = pneg %p16
    %p23 = scmp.eq.s32.totalorder %s7, 1
    %p24 = por %p22, %p23
    %p25 = scmp.ne.s32.totalorder %s17, %s20
    %p26 = scmp.eq.s32.totalorder %s7, 0
    %p27 = por %p25, %p26
    %p28 = scmp.ne.s32.totalorder %s17, %s20
    %p29 = scmp.eq.s32.totalorder %s12, 1
    %p30 = por %p28, %p29
    %p31 = scmp.ne.s32.totalorder %s20, %s21
    %p32 = scmp.eq.s32.totalorder %s12, 0
    %p33 = por %p31, %p32
    %p34 = scmp.ne.s32.totalorder %s20, %s21
    %p35 = scmp.eq.s32.totalorder %s13, 1
    %p36 = por %p34, %p35
    %p38 = scmp.ne.s32.totalorder %s21, %s37
    %p39 = scmp.eq.s32.totalorder %s13, 0
    %p40 = por %p38, %p39
    %s41 = ssub.s32 %s7, %s14
    %p42 = scmp.eq.s32.totalorder %s41, 0
    %s44 = sadd.s32 %s43, 1
    %s45 = scalar_select %p42, %s43, %s44
    %p48 = pneg %p42
    %p49 = scmp.eq.s32.totalorder %s7, 1
    %p50 = por %p48, %p49
    %p51 = scmp.ne.s32.totalorder %s43, %s46
    %p52 = scmp.eq.s32.totalorder %s7, 0
    %p53 = por %p51, %p52
    %p54 = scmp.ne.s32.totalorder %s43, %s46
    %p55 = scmp.eq.s32.totalorder %s12, 1
    %p56 = por %p54, %p55
    %p57 = scmp.ne.s32.totalorder %s46, %s47
    %p58 = scmp.eq.s32.totalorder %s12, 0
    %p59 = por %p57, %p58
    %p60 = scmp.ne.s32.totalorder %s46, %s47
    %p61 = scmp.eq.s32.totalorder %s13, 1
    %p62 = por %p60, %p61
    %p64 = scmp.ne.s32.totalorder %s47, %s63
    %p65 = scmp.eq.s32.totalorder %s13, 0
    %p66 = por %p64, %p65
    %p67 = scmp.le.s32.totalorder 1, %s7
    %p68 = scmp.lt.s32.totalorder %s7, 3
    %p69 = pnand %p67, %p68
    %p70 = pneg %p69
    // Predicated region
    $region9: #{multi_scale_attention.4} parent=5 // pred_check
      _
    $region10: #{multi_scale_attention.4} parent=5 // pred_check_branch
      %72 = sbr.rel (%p69) target = $region12
    $region11: #{multi_scale_attention.4} parent=5 // pred_region
      %s73 = ssub.s32 %s7, 1
    $region12: #{multi_scale_attention.4} parent=5 // pred_fallthru
      _
    %p74 = scmp.lt.s32.totalorder %s7, 2
    // Predicated region
    $region13: #{multi_scale_attention.4} parent=5 // pred_check
      %p75 = pneg %p74
    $region14: #{multi_scale_attention.4} parent=5 // pred_check_branch
      %77 = sbr.rel (%p75) target = $region16
    $region15: #{multi_scale_attention.4} parent=5 // pred_region
      // Predicated region
      $region17: #{multi_scale_attention.4} parent=15 // pred_check
        %p78 = pneg %p27
      $region18: #{multi_scale_attention.4} parent=15 // pred_check_branch
        %80 = sbr.rel (%p78) target = $region20
      $region19: #{multi_scale_attention.4} parent=15 // pred_region
        %p81 = scmp.lt.s32.totalorder %s7, 1
        %s82 = scalar_select %p81, %s7, 1
        %s83 = smul.addr %s82, 4
        %s84 = smul.addr %s83, 4
        %s85 = scalar_lea.vmem %s0, %s84
      $region20: #{multi_scale_attention.4} parent=15 // pred_fallthru
        _
    $region16: #{multi_scale_attention.4} parent=5 // pred_fallthru
      _
    %p86 = scmp.le.s32.totalorder 1, %s7
    %p87 = scmp.lt.s32.totalorder %s7, 3
    %p88 = pnand %p86, %p87
    %p89 = pneg %p88
    // Predicated region
    $region21: #{multi_scale_attention.4} parent=5 // pred_check
      _
    $region22: #{multi_scale_attention.4} parent=5 // pred_check_branch
      %91 = sbr.rel (%p88) target = $region24
    $region23: #{multi_scale_attention.4} parent=5 // pred_region
      %s92 = ssub.s32 %s7, 1
      %p93 = scmp.lt.s32.totalorder %s12, 1
      %s94 = scalar_select %p93, %s12, 1
      %s95 = smul.addr %s94, 4
      %s96 = smul.addr %s95, 4
      %s97 = scalar_lea.vmem %s0, %s96
      %p98 = pneg %p33
      %p99 = pneg %p30
      %p100 = pneg %p59
      %p101 = pneg %p56
      %p102 = scmp.lt.s32.totalorder %s12, 1
      %s103 = scalar_select %p102, %s12, 1
      %s104 = smul.addr %s103, 2
      %s105 = smul.addr %s104, 4
      %s106 = scalar_lea.vmem %s1, %s105
      %p107 = scmp.lt.s32.totalorder %s12, 1
      %s108 = scalar_select %p107, %s12, 1
      %s109 = smul.addr %s108, 4
      %s110 = smul.addr %s109, 4
      %s111 = scalar_lea.vmem %s0, %s110
      %p112 = scmp.lt.s32.totalorder %s12, 1
      %s113 = scalar_select %p112, %s12, 1
      %s114 = smul.addr %s113, 2
      %s115 = smul.addr %s114, 4
      %s116 = scalar_lea.vmem %s1, %s115
      %v118 = vld [vmem:[%s111] sm:$0xff]
      %v119 = vld [vmem:[%s111 + $0x8] sm:$0xff]
      %v122 = vunpack.c.l.b16 %v118
      %v123 = vunpack.c.l.b16 %v119
      %v124 = vpack.c.b16 %v123, %v122
      %125 = vrot.lane.b32.xlu0 %v124, 64
      %v126 = vpop.permute.xlu0 %125
      %vm127 = vcmask 523264
      %v129 = vsel %vm127, %v124, 0
      %v132 = vsel %vm127, %v126, 0
      %134 = vmatpush.bf16.xpose.msra.mxu0 0
      %135 = vmatpush.bf16.xpose.msra.mxu0 0
      %136 = vmatpush.bf16.xpose.msra.mxu0 0
      %137 = vmatpush.bf16.xpose.msra.mxu0 0
      %138 = vmatpush.bf16.xpose.msra.mxu0 0
      %139 = vmatpush.bf16.xpose.msra.mxu0 0
      %140 = vmatpush.bf16.xpose.msra.mxu0 0
      %141 = vmatpush.bf16.xpose.msra.mxu0 %v132
      %142 = vmatmul.bf16.gmra.mxu0 %v129
      %v143 = vpop.f32.mrf.mxu0
      %v144 = vadd.f32 0.0, %v143
      %v145 = vpop.f32.mrf.mxu0
      %v146 = vadd.f32 0.0, %v145
      %147 = vdwg.mxu0
      %vm148 = vcmask 130048
      %v149 = vsel %vm148, %v144, -inf
      %150 = vmax.xlane.f32.xlu0 %v149
      %v151 = vpop.xlane.xlu0 %150
      %v152 = vsel %vm148, %v146, -inf
      %153 = vmax.xlane.f32.xlu0 %v152
      %v154 = vpop.xlane.xlu0 %153
      %v155 = vsub.f32 %v144, %v151
      %v156 = vsub.f32 %v146, %v154
      %v157 = vmul.f32 %v155, 1.442695
      %v158 = vpow.pop %v157
      %v159 = vmul.f32 %v156, 1.442695
      %v160 = vpow.pop %v159
      %v161 = vsel %vm148, %v158, 0.0
      %162 = vadd.xlane.f32.xlu0 %v161
      %v163 = vpop.xlane.xlu0 %162
      %v164 = vsel %vm148, %v160, 0.0
      %165 = vadd.xlane.f32.xlu0 %v164
      %v166 = vpop.xlane.xlu0 %165
      %v167 = vpack.c.bf16 %v158, %v158
      %v168 = vpack.c.bf16 %v160, %v160
      %v169 = vrot.slane %v118, 4
      %v170 = vrot.slane %v119, 4
      %v173 = vunpack.c.l.b16 %v167
      %v174 = vunpack.c.l.b16 %v168
      %v175 = vpack.c.b16 %v174, %v173
      %v176 = vunpack.c.l.b16 %v169
      %v177 = vunpack.c.l.b16 %v170
      %v178 = vpack.c.b16 %v177, %v176
      %v181 = vsel %vm148, %v175, 0
      %183 = vmatpush.bf16.msra.mxu0 0
      %184 = vmatpush.bf16.msra.mxu0 0
      %185 = vmatpush.bf16.msra.mxu0 0
      %186 = vmatpush.bf16.msra.mxu0 0
      %187 = vmatpush.bf16.msra.mxu0 0
      %188 = vmatpush.bf16.msra.mxu0 0
      %189 = vmatpush.bf16.msra.mxu0 0
      %190 = vmatpush.bf16.msra.mxu0 %v178
      %191 = vmatmul.bf16.gmra.mxu0 %v181
      %v192 = vpop.f32.mrf.mxu0
      %v193 = vadd.f32 0.0, %v192
      %v194 = vpop.f32.mrf.mxu0
      %v195 = vadd.f32 0.0, %v194
      %196 = vdwg.mxu0
      %v197 = vrcp.pop %v163
      %v198 = vrcp.pop %v166
      %v199 = vmul.f32 %v193, %v197
      %v200 = vmul.f32 %v195, %v198
      %v201 = vpack.c.bf16 %v199, %v199
      %v202 = vpack.c.bf16 %v200, %v200
      %vm203 = vcmask 519168
      %204 = vst.msk [vmem:[%s116] sm:$0xf] %vm203, %v201
      %205 = vst.msk [vmem:[%s116 + $0x4] sm:$0xf] %vm203, %v202
      %p206 = scmp.lt.s32.totalorder %s12, 1
      %s207 = scalar_select %p206, %s12, 1
      %s208 = smul.addr %s207, 2
      %s209 = smul.addr %s208, 4
      %s210 = scalar_lea.vmem %s1, %s209
      // Predicated region
      $region25: #{multi_scale_attention.4} parent=23 // pred_check
        %p211 = pneg %p56
      $region26: #{multi_scale_attention.4} parent=23 // pred_check_branch
        %213 = sbr.rel (%p211) target = $region28
      $region27: #{multi_scale_attention.4} parent=23 // pred_region
        _
      $region28: #{multi_scale_attention.4} parent=23 // pred_fallthru
        _
    $region24: #{multi_scale_attention.4} parent=5 // pred_fallthru
      _
    %p214 = scmp.le.s32.totalorder 2, %s7
    // Predicated region
    $region29: #{multi_scale_attention.4} parent=5 // pred_check
      %p215 = pneg %p214
    $region30: #{multi_scale_attention.4} parent=5 // pred_check_branch
      %217 = sbr.rel (%p215) target = $region32
    $region31: #{multi_scale_attention.4} parent=5 // pred_region
      %s218 = ssub.s32 %s7, 2
      // Predicated region
      $region33: #{multi_scale_attention.4} parent=31 // pred_check
        %p219 = pneg %p62
      $region34: #{multi_scale_attention.4} parent=31 // pred_check_branch
        %221 = sbr.rel (%p219) target = $region36
      $region35: #{multi_scale_attention.4} parent=31 // pred_region
        %p222 = scmp.lt.s32.totalorder %s13, 1
        %s223 = scalar_select %p222, %s13, 1
        %s224 = smul.addr %s223, 2
        %s225 = smul.addr %s224, 4
        %s226 = scalar_lea.vmem %s1, %s225
      $region36: #{multi_scale_attention.4} parent=31 // pred_fallthru
        _
    $region32: #{multi_scale_attention.4} parent=5 // pred_fallthru
      _
  $region6: #{multi_scale_attention.4} parent=0 // loop_footer
    %s11 = sadd.s32 1, %s7
  $region7: #{multi_scale_attention.4} parent=0 // loop_footer_branch
    %6 = sbr.rel target = $region3
  $region8: #{multi_scale_attention.4} parent=0 // loop_exit
    _

// kernel: multi_scale_attention.5
$region0: #{multi_scale_attention.5}
  #allocation0 [shape = 'u32[]', space=smem, size = 0x4, offset = 0x4, fixed_abs, tag = 'smem constant byte address 0x4 - core index']
  #allocation1 [shape = 'u32[72,128]{1,0:T(1,128)}', space=vmem, size = 0x9000, scoped, tag = 'internal scratch']
  %s0 = inlined_call_operand.vmem [shape: bf16[2,4,256], index: 0, kind: input, shape index: {}]
  %s1 = inlined_call_operand.vmem [shape: bf16[4,36], index: 1, kind: input, shape index: {}]
  %s2 = inlined_call_operand.vmem [shape: f32[4,1], index: 2, kind: input, shape index: {}]
  %s3 = inlined_call_operand.vmem [shape: bf16[9,256], index: 3, kind: input, shape index: {}]
  %s4 = inlined_call_operand.vmem [shape: f32[2,4,256], index: 4, kind: output, shape index: {}]
  %s5 = sld [smem:[#allocation0]]
  $region49: #{multi_scale_attention.5} parent=0
    _
  %s7 = ssub.s32 1, %s5
  %s8 = scalar_select 0, %s7, %s5
  loop: start=0, step=1, limit=4
  $region2: #{multi_scale_attention.5} parent=0 // loop_pre_header
    _
  $region3: #{multi_scale_attention.5} parent=0 // loop_header
    %s10 = sphi 0, %s14
    %p11 = scmp.ge.s32.totalorder %s10, 4
    %s20 = sphi 0, %s22
    %s23 = sphi 0, %s20
    %s24 = sphi 0, %s23
    %s40 = sphi 0, %s24
    %s44 = sphi 0, %s44
    %s46 = sphi 0, %s44
    %s47 = sphi 0, %s46
    %s61 = sphi 0, %s47
    %s65 = sphi 0, %s65
    %s67 = sphi 0, %s65
    %s68 = sphi 0, %s67
    %s82 = sphi 0, %s68
    %s86 = sphi 0, %s86
    %s88 = sphi 0, %s86
    %s89 = sphi 0, %s88
    %s103 = sphi 0, %s89
    %s109 = sphi 0, %s111
    %s112 = sphi 0, %s109
    %s113 = sphi 0, %s112
    %s129 = sphi 0, %s113
  $region4: #{multi_scale_attention.5} parent=0 // loop_header_branch
    %13 = sbr.rel (%p11) target = $region8
  $region5: #{multi_scale_attention.5} parent=0 // loop_body
    %s15 = ssub.s32 %s10, 1
    %s16 = ssub.s32 %s10, 2
    %s17 = sadd.s32 %s10, 1
    %s18 = ssub.s32 %s10, %s17
    %p19 = scmp.eq.s32.totalorder %s18, 0
    %s21 = sadd.s32 %s20, 1
    %s22 = scalar_select %p19, %s20, %s21
    %p25 = pneg %p19
    %p26 = scmp.eq.s32.totalorder %s10, 1
    %p27 = por %p25, %p26
    %p28 = scmp.ne.s32.totalorder %s20, %s23
    %p29 = scmp.eq.s32.totalorder %s10, 0
    %p30 = por %p28, %p29
    %p31 = scmp.ne.s32.totalorder %s20, %s23
    %p32 = scmp.eq.s32.totalorder %s15, 1
    %p33 = por %p31, %p32
    %p34 = scmp.ne.s32.totalorder %s23, %s24
    %p35 = scmp.eq.s32.totalorder %s15, 0
    %p36 = por %p34, %p35
    %p37 = scmp.ne.s32.totalorder %s23, %s24
    %p38 = scmp.eq.s32.totalorder %s16, 1
    %p39 = por %p37, %p38
    %p41 = scmp.ne.s32.totalorder %s24, %s40
    %p42 = scmp.eq.s32.totalorder %s16, 0
    %p43 = por %p41, %p42
    %s45 = sadd.s32 %s44, 1
    %p48 = scmp.eq.s32.totalorder %s10, 1
    %p49 = scmp.ne.s32.totalorder %s44, %s46
    %p50 = scmp.eq.s32.totalorder %s10, 0
    %p51 = por %p49, %p50
    %p52 = scmp.ne.s32.totalorder %s44, %s46
    %p53 = scmp.eq.s32.totalorder %s15, 1
    %p54 = por %p52, %p53
    %p55 = scmp.ne.s32.totalorder %s46, %s47
    %p56 = scmp.eq.s32.totalorder %s15, 0
    %p57 = por %p55, %p56
    %p58 = scmp.ne.s32.totalorder %s46, %s47
    %p59 = scmp.eq.s32.totalorder %s16, 1
    %p60 = por %p58, %p59
    %p62 = scmp.ne.s32.totalorder %s47, %s61
    %p63 = scmp.eq.s32.totalorder %s16, 0
    %p64 = por %p62, %p63
    %s66 = sadd.s32 %s65, 1
    %p69 = scmp.eq.s32.totalorder %s10, 1
    %p70 = scmp.ne.s32.totalorder %s65, %s67
    %p71 = scmp.eq.s32.totalorder %s10, 0
    %p72 = por %p70, %p71
    %p73 = scmp.ne.s32.totalorder %s65, %s67
    %p74 = scmp.eq.s32.totalorder %s15, 1
    %p75 = por %p73, %p74
    %p76 = scmp.ne.s32.totalorder %s67, %s68
    %p77 = scmp.eq.s32.totalorder %s15, 0
    %p78 = por %p76, %p77
    %p79 = scmp.ne.s32.totalorder %s67, %s68
    %p80 = scmp.eq.s32.totalorder %s16, 1
    %p81 = por %p79, %p80
    %p83 = scmp.ne.s32.totalorder %s68, %s82
    %p84 = scmp.eq.s32.totalorder %s16, 0
    %p85 = por %p83, %p84
    %s87 = sadd.s32 %s86, 1
    %p90 = scmp.eq.s32.totalorder %s10, 1
    %p91 = scmp.ne.s32.totalorder %s86, %s88
    %p92 = scmp.eq.s32.totalorder %s10, 0
    %p93 = por %p91, %p92
    %p94 = scmp.ne.s32.totalorder %s86, %s88
    %p95 = scmp.eq.s32.totalorder %s15, 1
    %p96 = por %p94, %p95
    %p97 = scmp.ne.s32.totalorder %s88, %s89
    %p98 = scmp.eq.s32.totalorder %s15, 0
    %p99 = por %p97, %p98
    %p100 = scmp.ne.s32.totalorder %s88, %s89
    %p101 = scmp.eq.s32.totalorder %s16, 1
    %p102 = por %p100, %p101
    %p104 = scmp.ne.s32.totalorder %s89, %s103
    %p105 = scmp.eq.s32.totalorder %s16, 0
    %p106 = por %p104, %p105
    %s107 = ssub.s32 %s10, %s17
    %p108 = scmp.eq.s32.totalorder %s107, 0
    %s110 = sadd.s32 %s109, 1
    %s111 = scalar_select %p108, %s109, %s110
    %p114 = pneg %p108
    %p115 = scmp.eq.s32.totalorder %s10, 1
    %p116 = por %p114, %p115
    %p117 = scmp.ne.s32.totalorder %s109, %s112
    %p118 = scmp.eq.s32.totalorder %s10, 0
    %p119 = por %p117, %p118
    %p120 = scmp.ne.s32.totalorder %s109, %s112
    %p121 = scmp.eq.s32.totalorder %s15, 1
    %p122 = por %p120, %p121
    %p123 = scmp.ne.s32.totalorder %s112, %s113
    %p124 = scmp.eq.s32.totalorder %s15, 0
    %p125 = por %p123, %p124
    %p126 = scmp.ne.s32.totalorder %s112, %s113
    %p127 = scmp.eq.s32.totalorder %s16, 1
    %p128 = por %p126, %p127
    %p130 = scmp.ne.s32.totalorder %s113, %s129
    %p131 = scmp.eq.s32.totalorder %s16, 0
    %p132 = por %p130, %p131
    %p133 = scmp.le.s32.totalorder 1, %s10
    %p134 = scmp.lt.s32.totalorder %s10, 3
    %p135 = pnand %p133, %p134
    %p136 = pneg %p135
    // Predicated region
    $region9: #{multi_scale_attention.5} parent=5 // pred_check
      _
    $region10: #{multi_scale_attention.5} parent=5 // pred_check_branch
      %138 = sbr.rel (%p135) target = $region12
    $region11: #{multi_scale_attention.5} parent=5 // pred_region
      %s139 = ssub.s32 %s10, 1
      // Predicated region
      $region13: #{multi_scale_attention.5} parent=11 // pred_check
        %p140 = pneg %p57
      $region14: #{multi_scale_attention.5} parent=11 // pred_check_branch
        %142 = sbr.rel (%p140) target = $region16
      $region15: #{multi_scale_attention.5} parent=11 // pred_region
        _
      $region16: #{multi_scale_attention.5} parent=11 // pred_fallthru
        _
      // Predicated region
      $region17: #{multi_scale_attention.5} parent=11 // pred_check
        %p143 = pneg %p78
      $region18: #{multi_scale_attention.5} parent=11 // pred_check_branch
        %145 = sbr.rel (%p143) target = $region20
      $region19: #{multi_scale_attention.5} parent=11 // pred_region
        _
      $region20: #{multi_scale_attention.5} parent=11 // pred_fallthru
        _
      // Predicated region
      $region21: #{multi_scale_attention.5} parent=11 // pred_check
        %p146 = pneg %p99
      $region22: #{multi_scale_attention.5} parent=11 // pred_check_branch
        %148 = sbr.rel (%p146) target = $region24
      $region23: #{multi_scale_attention.5} parent=11 // pred_region
        _
      $region24: #{multi_scale_attention.5} parent=11 // pred_fallthru
        _
    $region12: #{multi_scale_attention.5} parent=5 // pred_fallthru
      _
    %p149 = scmp.lt.s32.totalorder %s10, 2
    // Predicated region
    $region25: #{multi_scale_attention.5} parent=5 // pred_check
      %p150 = pneg %p149
    $region26: #{multi_scale_attention.5} parent=5 // pred_check_branch
      %152 = sbr.rel (%p150) target = $region28
    $region27: #{multi_scale_attention.5} parent=5 // pred_region
      // Predicated region
      $region29: #{multi_scale_attention.5} parent=27 // pred_check
        %p153 = pneg %p30
      $region30: #{multi_scale_attention.5} parent=27 // pred_check_branch
        %155 = sbr.rel (%p153) target = $region32
      $region31: #{multi_scale_attention.5} parent=27 // pred_region
        %p156 = scmp.lt.s32.totalorder %s10, 1
        %s157 = scalar_select %p156, %s10, 1
        %s158 = smul.addr %s157, 2
        %s159 = smul.addr %s158, 2
        %s160 = scalar_lea.vmem %s0, %s159
      $region32: #{multi_scale_attention.5} parent=27 // pred_fallthru
        _
    $region28: #{multi_scale_attention.5} parent=5 // pred_fallthru
      _
    %p161 = scmp.le.s32.totalorder 1, %s10
    %p162 = scmp.lt.s32.totalorder %s10, 3
    %p163 = pnand %p161, %p162
    %p164 = pneg %p163
    // Predicated region
    $region33: #{multi_scale_attention.5} parent=5 // pred_check
      _
    $region34: #{multi_scale_attention.5} parent=5 // pred_check_branch
      %166 = sbr.rel (%p163) target = $region36
    $region35: #{multi_scale_attention.5} parent=5 // pred_region
      %s167 = ssub.s32 %s10, 1
      %p168 = scmp.lt.s32.totalorder %s15, 1
      %s169 = scalar_select %p168, %s15, 1
      %s170 = smul.addr %s169, 2
      %s171 = smul.addr %s170, 2
      %s172 = scalar_lea.vmem %s0, %s171
      %p173 = pneg %p36
      %p174 = pneg %p33
      %p175 = pneg %p57
      %p176 = pneg %p54
      %p177 = pneg %p78
      %p178 = pneg %p75
      %p179 = pneg %p99
      %p180 = pneg %p96
      %p181 = pneg %p125
      %p182 = pneg %p122
      %p183 = scmp.lt.s32.totalorder %s15, 1
      %s184 = scalar_select %p183, %s15, 1
      %s185 = smul.addr %s184, 2
      %s186 = smul.addr %s185, 4
      %s187 = scalar_lea.vmem %s4, %s186
      %p188 = scmp.lt.s32.totalorder %s15, 1
      %s189 = scalar_select %p188, %s15, 1
      %s190 = smul.addr %s189, 2
      %s191 = smul.addr %s190, 2
      %s192 = scalar_lea.vmem %s0, %s191
      %p193 = scmp.lt.s32.totalorder %s15, 1
      %s194 = scalar_select %p193, %s15, 1
      %s195 = smul.addr %s194, 2
      %s196 = smul.addr %s195, 4
      %s197 = scalar_lea.vmem %s4, %s196
      %v199 = vld [vmem:[%s192] sm:$0xf]
      %201 = vst [vmem:[#allocation1] ss:$4 sm:$0xff] %v199
      %v202 = vld.sshfl [vmem:[#allocation1 + $0x8] sm:$0xff pattern:$0x73625140]
      %204 = vrot.lane.b32.xlu0 %v202, 17
      %v205 = vpop.permute.xlu0 %204
      %206 = vst [vmem:[#allocation1] ss:$4 sm:$0xff] %v199
      %v207 = vld.sshfl [vmem:[#allocation1] sm:$0xff pattern:$0x73625140]
      %v209 = vld.sshfl [vmem:[#allocation1 + $0x8] sm:$0xff pattern:$0x73625140]
      %211 = vrot.lane.b32.xlu0 %v207, 17
      %v212 = vpop.permute.xlu0 %211
      %213 = vrot.lane.b32.xlu0 %v209, 17
      %v214 = vpop.permute.xlu0 %213
      %vm215 = vcmask 138240
      %v216 = vsel %vm215, %v212, %v214
      %vm218 = vcmask 138240
      %v221 = vsel %vm218, %v205, %v212
      %v223 = vld [vmem:[%s3] sm:$0x11]
      %v225 = vunpack.c.l.b16 %v223
      %v226 = vunpack.c.h.b16 %v223
      %v227 = vpack.c.b16 %v225, %v225
      %v228 = vpack.c.b16 %v226, %v226
      %v230 = vpack.i.b16 %v227, %v227
      %v232 = vperm.slane %v230, 0
      %v234 = vpack.i.b16 %v228, %v228
      %v236 = vperm.slane %v234, 0
      %v237 = vunpack.c.l.bf16 %v221
      %v238 = vunpack.c.l.bf16 %v216
      %v239 = vunpack.c.l.bf16 %v232
      %v240 = vunpack.c.l.bf16 %v236
      %v241 = vmul.f32 %v237, %v239
      %v242 = vmul.f32 %v238, %v240
      %v243 = vpack.c.bf16 %v242, %v241
      %244 = vst [vmem:[#allocation1] ss:$4 sm:$0xff] %v199
      %v245 = vld.sshfl [vmem:[#allocation1 + $0x8] sm:$0xff pattern:$0x73625140]
      %247 = vrot.lane.b32.xlu0 %v245, 16
      %v248 = vpop.permute.xlu0 %247
      %249 = vst [vmem:[#allocation1] ss:$4 sm:$0xff] %v199
      %v250 = vld.sshfl [vmem:[#allocation1] sm:$0xff pattern:$0x73625140]
      %v252 = vld.sshfl [vmem:[#allocation1 + $0x8] sm:$0xff pattern:$0x73625140]
      %254 = vrot.lane.b32.xlu0 %v250, 16
      %v255 = vpop.permute.xlu0 %254
      %256 = vrot.lane.b32.xlu0 %v252, 16
      %v257 = vpop.permute.xlu0 %256
      %vm258 = vcmask 130048
      %v259 = vsel %vm258, %v255, %v257
      %vm261 = vcmask 130048
      %v264 = vsel %vm261, %v248, %v255
      %v266 = vld [vmem:[%s3] sm:$0x11]
      %v268 = vunpack.c.l.b16 %v266
      %v269 = vunpack.c.h.b16 %v266
      %v270 = vpack.c.b16 %v268, %v268
      %v271 = vpack.c.b16 %v269, %v269
      %v273 = vshrl.u32 %v270, 16
      %v274 = vpack.i.b16 %v273, %v273
      %v276 = vperm.slane %v274, 0
      %v278 = vshrl.u32 %v271, 16
      %v279 = vpack.i.b16 %v278, %v278
      %v281 = vperm.slane %v279, 0
      %v282 = vunpack.c.l.bf16 %v264
      %v283 = vunpack.c.l.bf16 %v259
      %v284 = vunpack.c.l.bf16 %v276
      %v285 = vunpack.c.l.bf16 %v281
      %v286 = vmul.f32 %v282, %v284
      %v287 = vmul.f32 %v283, %v285
      %v288 = vpack.c.bf16 %v287, %v286
      %289 = vst [vmem:[#allocation1] ss:$4 sm:$0xff] %v199
      %v290 = vld.sshfl [vmem:[#allocation1 + $0x8] sm:$0xff pattern:$0x73625140]
      %292 = vrot.lane.b32.xlu0 %v290, 15
      %v293 = vpop.permute.xlu0 %292
      %294 = vst [vmem:[#allocation1] ss:$4 sm:$0xff] %v199
      %v295 = vld.sshfl [vmem:[#allocation1] sm:$0xff pattern:$0x73625140]
      %v297 = vld.sshfl [vmem:[#allocation1 + $0x8] sm:$0xff pattern:$0x73625140]
      %299 = vrot.lane.b32.xlu0 %v295, 15
      %v300 = vpop.permute.xlu0 %299
      %301 = vrot.lane.b32.xlu0 %v297, 15
      %v302 = vpop.permute.xlu0 %301
      %vm303 = vcmask 121856
      %v304 = vsel %vm303, %v300, %v302
      %vm306 = vcmask 121856
      %v309 = vsel %vm306, %v293, %v300
      %v311 = vld [vmem:[%s3] sm:$0x22]
      %v313 = vunpack.c.l.b16 %v311
      %v314 = vunpack.c.h.b16 %v311
      %v315 = vpack.c.b16 %v313, %v313
      %v316 = vpack.c.b16 %v314, %v314
      %v318 = vpack.i.b16 %v315, %v315
      %v320 = vperm.slane %v318, 1
      %v322 = vpack.i.b16 %v316, %v316
      %v324 = vperm.slane %v322, 1
      %v325 = vunpack.c.l.bf16 %v309
      %v326 = vunpack.c.l.bf16 %v304
      %v327 = vunpack.c.l.bf16 %v320
      %v328 = vunpack.c.l.bf16 %v324
      %v329 = vmul.f32 %v325, %v327
      %v330 = vmul.f32 %v326, %v328
      %v331 = vpack.c.bf16 %v330, %v329
      %332 = vst [vmem:[#allocation1] ss:$4 sm:$0xff] %v199
      %v333 = vld.sshfl [vmem:[#allocation1 + $0x8] sm:$0xff pattern:$0x73625140]
      %335 = vrot.lane.b32.xlu0 %v333, 1
      %v336 = vpop.permute.xlu0 %335
      %337 = vst [vmem:[#allocation1] ss:$4 sm:$0xff] %v199
      %v338 = vld.sshfl [vmem:[#allocation1] sm:$0xff pattern:$0x73625140]
      %v340 = vld.sshfl [vmem:[#allocation1 + $0x8] sm:$0xff pattern:$0x73625140]
      %342 = vrot.lane.b32.xlu0 %v338, 1
      %v343 = vpop.permute.xlu0 %342
      %344 = vrot.lane.b32.xlu0 %v340, 1
      %v345 = vpop.permute.xlu0 %344
      %vm346 = vcmask 7168
      %v347 = vsel %vm346, %v343, %v345
      %vm349 = vcmask 7168
      %v352 = vsel %vm349, %v336, %v343
      %v354 = vld [vmem:[%s3] sm:$0x22]
      %v356 = vunpack.c.l.b16 %v354
      %v357 = vunpack.c.h.b16 %v354
      %v358 = vpack.c.b16 %v356, %v356
      %v359 = vpack.c.b16 %v357, %v357
      %v361 = vshrl.u32 %v358, 16
      %v362 = vpack.i.b16 %v361, %v361
      %v364 = vperm.slane %v362, 1
      %v366 = vshrl.u32 %v359, 16
      %v367 = vpack.i.b16 %v366, %v366
      %v369 = vperm.slane %v367, 1
      %v370 = vunpack.c.l.bf16 %v352
      %v371 = vunpack.c.l.bf16 %v347
      %v372 = vunpack.c.l.bf16 %v364
      %v373 = vunpack.c.l.bf16 %v369
      %v374 = vmul.f32 %v370, %v372
      %v375 = vmul.f32 %v371, %v373
      %v376 = vpack.c.bf16 %v375, %v374
      %v377 = vld [vmem:[%s3] sm:$0x44]
      %v379 = vunpack.c.l.b16 %v377
      %v380 = vunpack.c.h.b16 %v377
      %v381 = vpack.c.b16 %v379, %v379
      %v382 = vpack.c.b16 %v380, %v380
      %v384 = vpack.i.b16 %v381, %v381
      %v386 = vperm.slane %v384, 2
      %v388 = vpack.i.b16 %v382, %v382
      %v390 = vperm.slane %v388, 2
      %v391 = vunpack.c.l.bf16 %v199
      %v392 = vunpack.c.l.bf16 %v386
      %v393 = vunpack.c.l.bf16 %v390
      %v396 = vrot.slane %v393, 4
      %vm397 = vcmask 1043456
      %v398 = vsel %vm397, %v392, %v396
      %v400 = vmul.f32 %v391, %v398
      %402 = vst [vmem:[#allocation1] ss:$2 sm:$0xff] %v400
      %v403 = vld.sshfl [vmem:[#allocation1] sm:$0xff pattern:$0x75316420]
      %v404 = vld.sshfl [vmem:[#allocation1 + $0x8] sm:$0xff pattern:$0x75316420]
      %v407 = vpack.c.bf16 %v404, %v403
      %408 = vst [vmem:[#allocation1] ss:$4 sm:$0xff] %v199
      %v409 = vld.sshfl [vmem:[#allocation1] sm:$0xff pattern:$0x73625140]
      %v411 = vld.sshfl [vmem:[#allocation1 + $0x8] sm:$0xff pattern:$0x73625140]
      %413 = vrot.lane.b32.xlu0 %v409, 127
      %v414 = vpop.permute.xlu0 %413
      %415 = vrot.lane.b32.xlu0 %v411, 127
      %v416 = vpop.permute.xlu0 %415
      %vm417 = vcmask 1039360
      %v418 = vsel %vm417, %v414, %v416
      %420 = vst [vmem:[#allocation1] ss:$4 sm:$0xff] %v199
      %v421 = vld.sshfl [vmem:[#allocation1] sm:$0xff pattern:$0x73625140]
      %423 = vrot.lane.b32.xlu0 %v421, 127
      %v424 = vpop.permute.xlu0 %423
      %vm425 = vcmask 1039360
      %v428 = vsel %vm425, %v416, %v424
      %v430 = vld [vmem:[%s3] sm:$0x44]
      %v432 = vunpack.c.l.b16 %v430
      %v433 = vunpack.c.h.b16 %v430
      %v434 = vpack.c.b16 %v432, %v432
      %v435 = vpack.c.b16 %v433, %v433
      %v437 = vshrl.u32 %v434, 16
      %v438 = vpack.i.b16 %v437, %v437
      %v440 = vperm.slane %v438, 2
      %v442 = vshrl.u32 %v435, 16
      %v443 = vpack.i.b16 %v442, %v442
      %v445 = vperm.slane %v443, 2
      %v446 = vunpack.c.l.bf16 %v418
      %v447 = vunpack.c.l.bf16 %v428
      %v448 = vunpack.c.l.bf16 %v440
      %v449 = vunpack.c.l.bf16 %v445
      %v450 = vmul.f32 %v446, %v448
      %v451 = vmul.f32 %v447, %v449
      %v452 = vpack.c.bf16 %v451, %v450
      %453 = vst [vmem:[#allocation1] ss:$4 sm:$0xff] %v199
      %v454 = vld.sshfl [vmem:[#allocation1] sm:$0xff pattern:$0x73625140]
      %v456 = vld.sshfl [vmem:[#allocation1 + $0x8] sm:$0xff pattern:$0x73625140]
      %458 = vrot.lane.b32.xlu0 %v454, 113
      %v459 = vpop.permute.xlu0 %458
      %460 = vrot.lane.b32.xlu0 %v456, 113
      %v461 = vpop.permute.xlu0 %460
      %vm462 = vcmask 924672
      %v463 = vsel %vm462, %v459, %v461
      %465 = vst [vmem:[#allocation1] ss:$4 sm:$0xff] %v199
      %v466 = vld.sshfl [vmem:[#allocation1] sm:$0xff pattern:$0x73625140]
      %468 = vrot.lane.b32.xlu0 %v466, 113
      %v469 = vpop.permute.xlu0 %468
      %vm470 = vcmask 924672
      %v473 = vsel %vm470, %v461, %v469
      %v475 = vld [vmem:[%s3] sm:$0x88]
      %v477 = vunpack.c.l.b16 %v475
      %v478 = vunpack.c.h.b16 %v475
      %v479 = vpack.c.b16 %v477, %v477
      %v480 = vpack.c.b16 %v478, %v478
      %v482 = vpack.i.b16 %v479, %v479
      %v484 = vperm.slane %v482, 3
      %v486 = vpack.i.b16 %v480, %v480
      %v488 = vperm.slane %v486, 3
      %v489 = vunpack.c.l.bf16 %v463
      %v490 = vunpack.c.l.bf16 %v473
      %v491 = vunpack.c.l.bf16 %v484
      %v492 = vunpack.c.l.bf16 %v488
      %v493 = vmul.f32 %v489, %v491
      %v494 = vmul.f32 %v490, %v492
      %v495 = vpack.c.bf16 %v494, %v493
      %496 = vst [vmem:[#allocation1] ss:$4 sm:$0xff] %v199
      %v497 = vld.sshfl [vmem:[#allocation1] sm:$0xff pattern:$0x73625140]
      %v499 = vld.sshfl [vmem:[#allocation1 + $0x8] sm:$0xff pattern:$0x73625140]
      %501 = vrot.lane.b32.xlu0 %v497, 112
      %v502 = vpop.permute.xlu0 %501
      %503 = vrot.lane.b32.xlu0 %v499, 112
      %v504 = vpop.permute.xlu0 %503
      %vm505 = vcmask 916480
      %v506 = vsel %vm505, %v502, %v504
      %508 = vst [vmem:[#allocation1] ss:$4 sm:$0xff] %v199
      %v509 = vld.sshfl [vmem:[#allocation1] sm:$0xff pattern:$0x73625140]
      %511 = vrot.lane.b32.xlu0 %v509, 112
      %v512 = vpop.permute.xlu0 %511
      %vm513 = vcmask 916480
      %v516 = vsel %vm513, %v504, %v512
      %v518 = vld [vmem:[%s3] sm:$0x88]
      %v520 = vunpack.c.l.b16 %v518
      %v521 = vunpack.c.h.b16 %v518
      %v522 = vpack.c.b16 %v520, %v520
      %v523 = vpack.c.b16 %v521, %v521
      %v525 = vshrl.u32 %v522, 16
      %v526 = vpack.i.b16 %v525, %v525
      %v528 = vperm.slane %v526, 3
      %v530 = vshrl.u32 %v523, 16
      %v531 = vpack.i.b16 %v530, %v530
      %v533 = vperm.slane %v531, 3
      %v534 = vunpack.c.l.bf16 %v506
      %v535 = vunpack.c.l.bf16 %v516
      %v536 = vunpack.c.l.bf16 %v528
      %v537 = vunpack.c.l.bf16 %v533
      %v538 = vmul.f32 %v534, %v536
      %v539 = vmul.f32 %v535, %v537
      %v540 = vpack.c.bf16 %v539, %v538
      %541 = vst [vmem:[#allocation1] ss:$4 sm:$0xff] %v199
      %v542 = vld.sshfl [vmem:[#allocation1] sm:$0xff pattern:$0x73625140]
      %v544 = vld.sshfl [vmem:[#allocation1 + $0x8] sm:$0xff pattern:$0x73625140]
      %546 = vrot.lane.b32.xlu0 %v542, 111
      %v547 = vpop.permute.xlu0 %546
      %548 = vrot.lane.b32.xlu0 %v544, 111
      %v549 = vpop.permute.xlu0 %548
      %vm550 = vcmask 908288
      %v551 = vsel %vm550, %v547, %v549
      %553 = vst [vmem:[#allocation1] ss:$4 sm:$0xff] %v199
      %v554 = vld.sshfl [vmem:[#allocation1] sm:$0xff pattern:$0x73625140]
      %556 = vrot.lane.b32.xlu0 %v554, 111
      %v557 = vpop.permute.xlu0 %556
      %vm558 = vcmask 908288
      %v561 = vsel %vm558, %v549, %v557
      %v563 = vld [vmem:[%s3 + $0x8] sm:$0x11]
      %v565 = vunpack.c.l.b16 %v563
      %v566 = vunpack.c.h.b16 %v563
      %v567 = vpack.c.b16 %v565, %v565
      %v568 = vpack.c.b16 %v566, %v566
      %v570 = vpack.i.b16 %v567, %v567
      %v572 = vperm.slane %v570, 0
      %v574 = vpack.i.b16 %v568, %v568
      %v576 = vperm.slane %v574, 0
      %v577 = vunpack.c.l.bf16 %v551
      %v578 = vunpack.c.l.bf16 %v561
      %v579 = vunpack.c.l.bf16 %v572
      %v580 = vunpack.c.l.bf16 %v576
      %v581 = vmul.f32 %v577, %v579
      %v582 = vmul.f32 %v578, %v580
      %v583 = vpack.c.bf16 %v582, %v581
      %v585 = vunpack.c.l.b16 %v243
      %v586 = vunpack.c.h.b16 %v243
      %v587 = vpack.c.b16 %v585, %v585
      %v588 = vpack.c.b16 %v586, %v586
      %v590 = vunpack.c.l.b16 %v288
      %v591 = vunpack.c.h.b16 %v288
      %v592 = vpack.c.b16 %v590, %v590
      %v593 = vpack.c.b16 %v591, %v591
      %v594 = vrot.slane %v592, 6
      %v595 = vrot.slane %v593, 6
      %v597 = vunpack.c.l.b16 %v331
      %v598 = vunpack.c.h.b16 %v331
      %v599 = vpack.c.b16 %v597, %v597
      %v600 = vpack.c.b16 %v598, %v598
      %v602 = vunpack.c.l.b16 %v376
      %v603 = vunpack.c.h.b16 %v376
      %v604 = vpack.c.b16 %v602, %v602
      %v605 = vpack.c.b16 %v603, %v603
      %v606 = vrot.slane %v604, 2
      %v607 = vrot.slane %v605, 2
      %v609 = vunpack.c.l.b16 %v407
      %v610 = vunpack.c.h.b16 %v407
      %v611 = vpack.c.b16 %v609, %v609
      %v612 = vpack.c.b16 %v610, %v610
      %v614 = vunpack.c.l.b16 %v452
      %v615 = vunpack.c.h.b16 %v452
      %v616 = vpack.c.b16 %v614, %v614
      %v617 = vpack.c.b16 %v615, %v615
      %v618 = vrot.slane %v616, 6
      %v619 = vrot.slane %v617, 6
      %v621 = vunpack.c.l.b16 %v495
      %v622 = vunpack.c.h.b16 %v495
      %v623 = vpack.c.b16 %v621, %v621
      %v624 = vpack.c.b16 %v622, %v622
      %v626 = vunpack.c.l.b16 %v540
      %v627 = vunpack.c.h.b16 %v540
      %v628 = vpack.c.b16 %v626, %v626
      %v629 = vpack.c.b16 %v627, %v627
      %v630 = vrot.slane %v628, 2
      %v631 = vrot.slane %v629, 2
      %v633 = vunpack.c.l.b16 %v583
      %v634 = vunpack.c.h.b16 %v583
      %v635 = vpack.c.b16 %v633, %v633
      %v636 = vpack.c.b16 %v634, %v634
      %vm637 = vcmask 1041408
      %v640 = vsel %vm637, %v587, %v594
      %v643 = vsel %vm637, %v588, %v595
      %v645 = vsel %vm397, %v640, %v599
      %v647 = vsel %vm397, %v643, %v600
      %vm648 = vcmask 1045504
      %v650 = vsel %vm648, %v645, %v606
      %v653 = vsel %vm648, %v647, %v607
      %v657 = vsel %vm637, %v611, %v618
      %v660 = vsel %vm637, %v612, %v619
      %v662 = vsel %vm397, %v657, %v623
      %v664 = vsel %vm397, %v660, %v624
      %v666 = vsel %vm648, %v662, %v630
      %v669 = vsel %vm648, %v664, %v631
      %v671 = vld [vmem:[%s1] sm:$0x3]
      %v672 = vld [vmem:[%s2] sm:$0xf]
      %674 = vset.pattern.permute.xlu0 0
      %675 = vperm.xlu0 %674, %v672
      %v676 = vpop.permute.xlu0 %675
      %vm678 = vcmask 293888
      %v680 = vsel %vm678, %v671, 0
      %v683 = vsel %vm637, %v635, 0
      %v686 = vsel %vm637, %v636, 0
      %688 = vmatpush.bf16.msra.mxu0 0
      %689 = vmatpush.bf16.msra.mxu0 0
      %690 = vmatpush.bf16.msra.mxu0 0
      %691 = vmatpush.bf16.msra.mxu0 0
      %692 = vmatpush.bf16.msra.mxu0 0
      %693 = vmatpush.bf16.msra.mxu0 %v683
      %694 = vmatpush.bf16.msra.mxu0 %v666
      %695 = vmatpush.bf16.msra.mxu0 %v650
      %696 = vmatmul.bf16.gmra.mxu0 %v680
      %v697 = vpop.f32.mrf.mxu0
      %v698 = vadd.f32 %v676, %v697
      %v699 = vpop.f32.mrf.mxu0
      %700 = vdwg.mxu0
      %701 = vmatpush.bf16.msra.mxu0 0
      %702 = vmatpush.bf16.msra.mxu0 0
      %703 = vmatpush.bf16.msra.mxu0 0
      %704 = vmatpush.bf16.msra.mxu0 0
      %705 = vmatpush.bf16.msra.mxu0 0
      %706 = vmatpush.bf16.msra.mxu0 %v686
      %707 = vmatpush.bf16.msra.mxu0 %v669
      %708 = vmatpush.bf16.msra.mxu0 %v653
      %709 = vmatmul.bf16.gmra.mxu0 %v680
      %v710 = vpop.f32.mrf.mxu0
      %v711 = vadd.f32 %v676, %v710
      %v712 = vpop.f32.mrf.mxu0
      %713 = vdwg.mxu0
      %vm714 = vcmp.ge.f32.partialorder %v698, 0.0
      %vm715 = vcmp.ge.f32.partialorder %v711, 0.0
      %v716 = vmul.f32 %v698, 0.2
      %v717 = vmul.f32 %v711, 0.2
      %v718 = vsel %vm714, %v698, %v716
      %v719 = vsel %vm715, %v711, %v717
      %v722 = vrot.slane %v719, 4
      %v723 = vsel %vm397, %v718, %v722
      %725 = vst [vmem:[%s197] sm:$0xff] %v723
      %p726 = scmp.lt.s32.totalorder %s15, 1
      %s727 = scalar_select %p726, %s15, 1
      %s728 = smul.addr %s727, 2
      %s729 = smul.addr %s728, 4
      %s730 = scalar_lea.vmem %s4, %s729
      // Predicated region
      $region37: #{multi_scale_attention.5} parent=35 // pred_check
        %p731 = pneg %p122
      $region38: #{multi_scale_attention.5} parent=35 // pred_check_branch
        %733 = sbr.rel (%p731) target = $region40
      $region39: #{multi_scale_attention.5} parent=35 // pred_region
        _
      $region40: #{multi_scale_attention.5} parent=35 // pred_fallthru
        _
    $region36: #{multi_scale_attention.5} parent=5 // pred_fallthru
      _
    %p734 = scmp.le.s32.totalorder 2, %s10
    // Predicated region
    $region41: #{multi_scale_attention.5} parent=5 // pred_check
      %p735 = pneg %p734
    $region42: #{multi_scale_attention.5} parent=5 // pred_check_branch
      %737 = sbr.rel (%p735) target = $region44
    $region43: #{multi_scale_attention.5} parent=5 // pred_region
      %s738 = ssub.s32 %s10, 2
      // Predicated region
      $region45: #{multi_scale_attention.5} parent=43 // pred_check
        %p739 = pneg %p128
      $region46: #{multi_scale_attention.5} parent=43 // pred_check_branch
        %741 = sbr.rel (%p739) target = $region48
      $region47: #{multi_scale_attention.5} parent=43 // pred_region
        %p742 = scmp.lt.s32.totalorder %s16, 1
        %s743 = scalar_select %p742, %s16, 1
        %s744 = smul.addr %s743, 2
        %s745 = smul.addr %s744, 4
        %s746 = scalar_lea.vmem %s4, %s745
      $region48: #{multi_scale_attention.5} parent=43 // pred_fallthru
        _
    $region44: #{multi_scale_attention.5} parent=5 // pred_fallthru
      _
  $region6: #{multi_scale_attention.5} parent=0 // loop_footer
    %s14 = sadd.s32 1, %s10
  $region7: #{multi_scale_attention.5} parent=0 // loop_footer_branch
    %9 = sbr.rel target = $region3
  $region8: #{multi_scale_attention.5} parent=0 // loop_exit
    _

</llo_original>
